<compile_context>
chip_gen: v5e
topology: v5e:2x2
jax: 0.10.0
libtpu: 0.0.40
codegen_flags: <defaults>
</compile_context>

<pallas_src>
import functools

import jax
import jax.numpy as jnp
from jax.experimental import pallas as pl
from jax.experimental.pallas import tpu as pltpu

LANE = 128


def _round_up(x, m):
    return (x + m - 1) // m * m


def _pad2(a, n0, n1):
    return jnp.pad(a, ((0, n0 - a.shape[0]), (0, n1 - a.shape[1])))


# ----------------------------------------------------------------------------
# Fused forward kernel: grid = (num_layers, num_relations)
# ----------------------------------------------------------------------------
def fused_rgcn_kernel(x_ref, ftw_ref, ftb_ref, adj_ref, wrel_ref, wself_ref,
                      bias_ref, wrelT_ref, suT_ref, svT_ref, srT_ref,
                      scores_ref, h_ref, acc_ref, *, num_layers):
    l = pl.program_id(0)          # encoder layer   (sequential)
    r = pl.program_id(1)          # relation        (reduction, minormost)

    # ---- layer prologue: produce this layer's input h, init accumulator -----
    @pl.when(r == 0)
    def _start_layer():
        @pl.when(l == 0)
        def _():
            # MLPFeatureTransformer: Linear + ReLU
            h_ref[...] = jnp.maximum(
                jnp.dot(x_ref[...], ftw_ref[...],
                        preferred_element_type=jnp.float32) + ftb_ref[...],
                0.0)

        @pl.when(l > 0)
        def _():
            # inter-layer ReLU (applied to every encoder layer except the last)
            h_ref[...] = jnp.maximum(acc_ref[...], 0.0)

        # self-loop + bias, computed exactly once per layer
        acc_ref[...] = (
            jnp.dot(h_ref[...], wself_ref[0],
                    preferred_element_type=jnp.float32) + bias_ref[0])

    # ---- per-relation message passing:  acc += A_r @ (h @ W_{l,r}) ----------
    hw = jnp.dot(h_ref[...], wrel_ref[0, 0], preferred_element_type=jnp.float32)
    acc_ref[...] += jnp.dot(adj_ref[0], hw, preferred_element_type=jnp.float32)

    # ---- epilogue: DistMult decoder on the final embeddings ------------------
    @pl.when(jnp.logical_and(l == num_layers - 1, r == pl.num_programs(1) - 1))
    def _decode():
        emb_t = acc_ref[...].T                    # (H, N); last layer: no ReLU
        u_t = jnp.dot(emb_t, suT_ref[...], preferred_element_type=jnp.float32)
        v_t = jnp.dot(emb_t, svT_ref[...], preferred_element_type=jnp.float32)
        r_t = jnp.dot(wrelT_ref[...], srT_ref[...],
                      preferred_element_type=jnp.float32)
        # lane-dense (1, E) store of the DistMult scores
        scores_ref[...] = jnp.sum(u_t * r_t * v_t, axis=0,
                                  keepdims=True).astype(scores_ref.dtype)


# ----------------------------------------------------------------------------
# Wrapper: padding, param prep, pallas_call
# ----------------------------------------------------------------------------
def rgcn_link_prediction_forward(params, adj, x, pos_edges, neg_edges):
    N, F = x.shape
    H = params["ft_w"].shape[1]
    R = adj.shape[0]
    L = len(params["layers"])

    n_pos = pos_edges[0].shape[0]
    n_neg = neg_edges[0].shape[0]
    n_edges = n_pos + n_neg

    # lane-dense zero padding (exact: padded rows/cols never reach real outputs)
    n_pad = _round_up(N, LANE)
    f_pad = _round_up(F, LANE)
    h_pad = _round_up(H, LANE)
    e_pad = _round_up(n_edges, LANE)

    x_p = _pad2(x, n_pad, f_pad)
    ftw_p = _pad2(params["ft_w"], f_pad, h_pad)
    ftb_p = jnp.pad(params["ft_b"], (0, h_pad - H)).reshape(1, h_pad)
    adj_p = jnp.pad(adj, ((0, 0), (0, n_pad - N), (0, n_pad - N)))

    # Collapse the basis decomposition outside the kernel: W_r = sum_b c_rb V_b
    w_rel_all, w_self_all, bias_all = [], [], []
    for bases, coeff, w_self, bias in params["layers"]:
        w_rel = jnp.einsum("rb,bij->rij", coeff, bases)            # (R, H, H)
        w_rel_all.append(jnp.pad(w_rel, ((0, 0), (0, h_pad - H), (0, h_pad - H))))
        w_self_all.append(_pad2(w_self, h_pad, h_pad))
        bias_all.append(jnp.pad(bias, (0, h_pad - H)).reshape(1, h_pad))
    w_rel_all = jnp.stack(w_rel_all)                               # (L, R, Hp, Hp)
    w_self_all = jnp.stack(w_self_all)                             # (L, Hp, Hp)
    bias_all = jnp.stack(bias_all)                                 # (L, 1, Hp)

    w_rel_T = _pad2(params["w_relation"].T, h_pad, R)              # (Hp, R)

    # One-hot selector matrices for the decoder gathers (done in-kernel on MXU)
    u_idx = jnp.concatenate([pos_edges[0], neg_edges[0]]).astype(jnp.int32)
    v_idx = jnp.concatenate([pos_edges[1], neg_edges[1]]).astype(jnp.int32)
    e_typ = jnp.concatenate([pos_edges[2], neg_edges[2]]).astype(jnp.int32)

    def one_hot_t(idx, rows):
        cols = jnp.full((e_pad,), -1, jnp.int32).at[:idx.shape[0]].set(idx)
        return (jnp.arange(rows, dtype=jnp.int32)[:, None] == cols[None, :]
                ).astype(jnp.float32)

    s_u = one_hot_t(u_idx, n_pad)                                  # (Np, Ep)
    s_v = one_hot_t(v_idx, n_pad)                                  # (Np, Ep)
    s_r = one_hot_t(e_typ, R)                                      # (R,  Ep)

    kernel = functools.partial(fused_rgcn_kernel, num_layers=L)

    def full(shape):
        nd = len(shape)
        return pl.BlockSpec(shape, lambda l, r: (0,) * nd)

    scores = pl.pallas_call(
        kernel,
        out_shape=jax.ShapeDtypeStruct((1, e_pad), jnp.float32),
        grid_spec=pltpu.PrefetchScalarGridSpec(
            num_scalar_prefetch=0,
            grid=(L, R),
            in_specs=[
                full((n_pad, f_pad)),                                       # x
                full((f_pad, h_pad)),                                       # ft_w
                full((1, h_pad)),                                           # ft_b
                pl.BlockSpec((1, n_pad, n_pad), lambda l, r: (r, 0, 0)),    # adj[r]
                pl.BlockSpec((1, 1, h_pad, h_pad), lambda l, r: (l, r, 0, 0)),  # W_rel[l,r]
                pl.BlockSpec((1, h_pad, h_pad), lambda l, r: (l, 0, 0)),    # W_self[l]
                pl.BlockSpec((1, 1, h_pad), lambda l, r: (l, 0, 0)),        # bias[l]
                full((h_pad, R)),                                           # w_relation^T
                full((n_pad, e_pad)),                                       # S_u^T
                full((n_pad, e_pad)),                                       # S_v^T
                full((R, e_pad)),                                           # S_r^T
            ],
            out_specs=pl.BlockSpec((1, e_pad), lambda l, r: (0, 0)),
            scratch_shapes=[pltpu.VMEM((n_pad, h_pad), jnp.float32),        # h
                            pltpu.VMEM((n_pad, h_pad), jnp.float32)],       # acc
        ),
        compiler_params=pltpu.CompilerParams(
            dimension_semantics=("arbitrary", "arbitrary")),
    )(x_p, ftw_p, ftb_p, adj_p, w_rel_all, w_self_all, bias_all,
      w_rel_T, s_u, s_v, s_r)

    scores = scores[0]
    return scores[:n_pos], scores[n_pos:n_pos + n_neg]


# ----------------------------------------------------------------------------
# Parameters / graph construction / pure-JAX reference
# ----------------------------------------------------------------------------
def init_params(key, in_size, hidden, num_rels, num_bases, num_layers):
    ks = jax.random.split(key, 2 + num_layers)
    scale = lambda fan_in: 1.0 / jnp.sqrt(jnp.float32(fan_in))
    params = {
        "ft_w": jax.random.normal(ks[0], (in_size, hidden), jnp.float32) * scale(in_size),
        "ft_b": jnp.zeros((hidden,), jnp.float32),
        "w_relation": jax.random.normal(ks[1], (num_rels, hidden), jnp.float32) * scale(hidden),
        "layers": [],
    }
    for l in range(num_layers):
        k0, k1, k2 = jax.random.split(ks[2 + l], 3)
        bases = jax.random.normal(k0, (num_bases, hidden, hidden), jnp.float32) * scale(hidden)
        coeff = jax.random.normal(k1, (num_rels, num_bases), jnp.float32) * scale(num_bases)
        w_self = jax.random.normal(k2, (hidden, hidden), jnp.float32) * scale(hidden)
        bias = jnp.zeros((hidden,), jnp.float32)
        params["layers"].append((bases, coeff, w_self, bias))
    return params


def build_norm_adj(src, dst, etype, num_nodes, num_rels):
    # dense per-relation adjacency with in-degree ("right") normalization
    adj = jnp.zeros((num_rels, num_nodes, num_nodes), jnp.float32)
    adj = adj.at[etype, dst, src].add(1.0)
    indeg = adj.sum(axis=-1, keepdims=True)
    return adj * jnp.where(indeg > 0, 1.0 / indeg, 0.0)


def reference_forward(params, adj, x, pos_edges, neg_edges):
    h = jnp.maximum(x @ params["ft_w"] + params["ft_b"], 0.0)
    num_layers = len(params["layers"])
    for li, (bases, coeff, w_self, bias) in enumerate(params["layers"]):
        w_rel = jnp.einsum("rb,bij->rij", coeff, bases)
        hw = jnp.einsum("nh,rhk->rnk", h, w_rel)
        agg = jnp.einsum("rnm,rmk->nk", adj, hw)
        out = h @ w_self + bias + agg
        h = jnp.maximum(out, 0.0) if li < num_layers - 1 else out

    def score(edges):
        u_idx, v_idx, et = edges
        return jnp.sum(h[u_idx] * params["w_relation"][et] * h[v_idx], axis=-1)

    return score(pos_edges), score(neg_edges)


if __name__ == "__main__":
    N, IN, H = 64, 32, 32           # nodes, input feature dim, hidden size
    R, B, L = 3, 2, 2               # num etypes, num bases, num encoder layers
    E_G, E_POS, E_NEG = 256, 64, 64

    key = jax.random.PRNGKey(0)
    ks = jax.random.split(key, 11)

    x = jax.random.normal(ks[0], (N, IN), jnp.float32)

    g_src = jax.random.randint(ks[1], (E_G,), 0, N)
    g_dst = jax.random.randint(ks[2], (E_G,), 0, N)
    g_et = jax.random.randint(ks[3], (E_G,), 0, R)
    adj = build_norm_adj(g_src, g_dst, g_et, N, R)

    pos_edges = (jax.random.randint(ks[4], (E_POS,), 0, N),
                 jax.random.randint(ks[5], (E_POS,), 0, N),
                 jax.random.randint(ks[6], (E_POS,), 0, R))
    neg_edges = (jax.random.randint(ks[7], (E_NEG,), 0, N),
                 jax.random.randint(ks[8], (E_NEG,), 0, N),
                 jax.random.randint(ks[9], (E_NEG,), 0, R))

    params = init_params(ks[10], IN, H, R, B, L)

    forward = jax.jit(rgcn_link_prediction_forward)
    pos_scores, neg_scores = forward(params, adj, x, pos_edges, neg_edges)
    jax.block_until_ready((pos_scores, neg_scores))

    assert pos_scores.shape == (E_POS,) and neg_scores.shape == (E_NEG,)

    ref_pos, ref_neg = reference_forward(params, adj, x, pos_edges, neg_edges)
    assert jnp.allclose(pos_scores, ref_pos, rtol=2e-2, atol=2e-2)
    assert jnp.allclose(neg_scores, ref_neg, rtol=2e-2, atol=2e-2)
    print("KERNEL_OK")
</pallas_src>

<mosaic_0001>
module attributes {stable_mosaic.version = 11 : i64} {
  func.func @fused_rgcn_kernel(%arg0: i32, %arg1: i32, %arg2: memref<128x128xf32, #tpu.memory_space<vmem>>, %arg3: memref<128x128xf32, #tpu.memory_space<vmem>>, %arg4: memref<1x128xf32, #tpu.memory_space<vmem>>, %arg5: memref<1x128x128xf32, #tpu.memory_space<vmem>>, %arg6: memref<1x1x128x128xf32, #tpu.memory_space<vmem>>, %arg7: memref<1x128x128xf32, #tpu.memory_space<vmem>>, %arg8: memref<1x1x128xf32, #tpu.memory_space<vmem>>, %arg9: memref<128x3xf32, #tpu.memory_space<vmem>>, %arg10: memref<128x128xf32, #tpu.memory_space<vmem>>, %arg11: memref<128x128xf32, #tpu.memory_space<vmem>>, %arg12: memref<3x128xf32, #tpu.memory_space<vmem>>, %arg13: memref<1x128xf32, #tpu.memory_space<vmem>>, %arg14: memref<128x128xf32, #tpu.memory_space<vmem>>, %arg15: memref<128x128xf32, #tpu.memory_space<vmem>>) attributes {dimension_semantics = [#tpu.dimension_semantics<arbitrary>, #tpu.dimension_semantics<arbitrary>], iteration_bounds = array<i64: 2, 3>, scalar_prefetch = 0 : i64, scratch_operands = 2 : i64, tpu.core_type = #tpu.core_type<tc>, window_params = [{pipeline_mode = #tpu.pipeline_mode<synchronous>, transform_indices = @transform_0, window_bounds = array<i64: 128, 128>}, {pipeline_mode = #tpu.pipeline_mode<synchronous>, transform_indices = @transform_1, window_bounds = array<i64: 128, 128>}, {pipeline_mode = #tpu.pipeline_mode<synchronous>, transform_indices = @transform_2, window_bounds = array<i64: 1, 128>}, {transform_indices = @transform_3, window_bounds = array<i64: 1, 128, 128>}, {transform_indices = @transform_4, window_bounds = array<i64: 1, 1, 128, 128>}, {transform_indices = @transform_5, window_bounds = array<i64: 1, 128, 128>}, {transform_indices = @transform_6, window_bounds = array<i64: 1, 1, 128>}, {pipeline_mode = #tpu.pipeline_mode<synchronous>, transform_indices = @transform_7, window_bounds = array<i64: 128, 3>}, {pipeline_mode = #tpu.pipeline_mode<synchronous>, transform_indices = @transform_8, window_bounds = array<i64: 128, 128>}, {pipeline_mode = #tpu.pipeline_mode<synchronous>, transform_indices = @transform_9, window_bounds = array<i64: 128, 128>}, {pipeline_mode = #tpu.pipeline_mode<synchronous>, transform_indices = @transform_10, window_bounds = array<i64: 3, 128>}, {pipeline_mode = #tpu.pipeline_mode<synchronous>, transform_indices = @transform_11, window_bounds = array<i64: 1, 128>}]} {
    %c0_i32 = arith.constant 0 : i32
    %0 = arith.cmpi eq, %arg1, %c0_i32 : i32
    %1 = arith.extui %0 : i1 to i32
    %c0_i32_0 = arith.constant 0 : i32
    %2 = arith.cmpi ne, %1, %c0_i32_0 : i32
    scf.if %2 {
      %c0_i32_15 = arith.constant 0 : i32
      %18 = arith.cmpi eq, %arg0, %c0_i32_15 : i32
      %19 = arith.extui %18 : i1 to i32
      %c0_i32_16 = arith.constant 0 : i32
      %20 = arith.cmpi ne, %19, %c0_i32_16 : i32
      scf.if %20 {
        %c0_30 = arith.constant 0 : index
        %c0_31 = arith.constant 0 : index
        %33 = vector.load %arg2[%c0_30, %c0_31] : memref<128x128xf32, #tpu.memory_space<vmem>>, vector<128x128xf32>
        %c0_32 = arith.constant 0 : index
        %c0_33 = arith.constant 0 : index
        %34 = vector.load %arg3[%c0_32, %c0_33] : memref<128x128xf32, #tpu.memory_space<vmem>>, vector<128x128xf32>
        %cst_34 = arith.constant dense<0.000000e+00> : vector<128x128xf32>
        %35 = tpu.matmul %33, %34, %cst_34 {dimension_numbers = #tpu.dot_dimension_numbers<[1], [0], [0], [1], [0, 0, 1, 1], [], []>} : vector<128x128xf32>, vector<128x128xf32>, vector<128x128xf32> -> vector<128x128xf32>
        %c0_35 = arith.constant 0 : index
        %c0_36 = arith.constant 0 : index
        %36 = vector.load %arg4[%c0_35, %c0_36] : memref<1x128xf32, #tpu.memory_space<vmem>>, vector<1x128xf32>
        %37 = vector.broadcast %36 : vector<1x128xf32> to vector<128x128xf32>
        %38 = arith.addf %35, %37 : vector<128x128xf32>
        %cst_37 = arith.constant 0.000000e+00 : f32
        %39 = vector.broadcast %cst_37 : f32 to vector<128x128xf32>
        %40 = arith.maximumf %38, %39 : vector<128x128xf32>
        %c0_38 = arith.constant 0 : index
        %c0_39 = arith.constant 0 : index
        %41 = vector.load %arg14[%c0_38, %c0_39] : memref<128x128xf32, #tpu.memory_space<vmem>>, vector<128x128xf32>
        tpu.vector_store %arg14[%c0_38, %c0_39], %40 {strides = array<i32>} : memref<128x128xf32, #tpu.memory_space<vmem>>, vector<128x128xf32>,
      } else {
      }
      %c0_i32_17 = arith.constant 0 : i32
      %21 = arith.cmpi sgt, %arg0, %c0_i32_17 : i32
      %22 = arith.extui %21 : i1 to i32
      %c0_i32_18 = arith.constant 0 : i32
      %23 = arith.cmpi ne, %22, %c0_i32_18 : i32
      scf.if %23 {
        %c0_30 = arith.constant 0 : index
        %c0_31 = arith.constant 0 : index
        %33 = vector.load %arg15[%c0_30, %c0_31] : memref<128x128xf32, #tpu.memory_space<vmem>>, vector<128x128xf32>
        %cst_32 = arith.constant 0.000000e+00 : f32
        %34 = vector.broadcast %cst_32 : f32 to vector<128x128xf32>
        %35 = arith.maximumf %33, %34 : vector<128x128xf32>
        %c0_33 = arith.constant 0 : index
        %c0_34 = arith.constant 0 : index
        %36 = vector.load %arg14[%c0_33, %c0_34] : memref<128x128xf32, #tpu.memory_space<vmem>>, vector<128x128xf32>
        tpu.vector_store %arg14[%c0_33, %c0_34], %35 {strides = array<i32>} : memref<128x128xf32, #tpu.memory_space<vmem>>, vector<128x128xf32>,
      } else {
      }
      %c0_19 = arith.constant 0 : index
      %c0_20 = arith.constant 0 : index
      %24 = vector.load %arg14[%c0_19, %c0_20] : memref<128x128xf32, #tpu.memory_space<vmem>>, vector<128x128xf32>
      %c0_21 = arith.constant 0 : index
      %c0_22 = arith.constant 0 : index
      %c0_23 = arith.constant 0 : index
      %25 = vector.load %arg7[%c0_21, %c0_22, %c0_23] : memref<1x128x128xf32, #tpu.memory_space<vmem>>, vector<1x128x128xf32>
      %26 = vector.shape_cast %25 : vector<1x128x128xf32> to vector<128x128xf32>
      %cst_24 = arith.constant dense<0.000000e+00> : vector<128x128xf32>
      %27 = tpu.matmul %24, %26, %cst_24 {dimension_numbers = #tpu.dot_dimension_numbers<[1], [0], [0], [1], [0, 0, 1, 1], [], []>} : vector<128x128xf32>, vector<128x128xf32>, vector<128x128xf32> -> vector<128x128xf32>
      %c0_25 = arith.constant 0 : index
      %c0_26 = arith.constant 0 : index
      %c0_27 = arith.constant 0 : index
      %28 = vector.load %arg8[%c0_25, %c0_26, %c0_27] : memref<1x1x128xf32, #tpu.memory_space<vmem>>, vector<1x1x128xf32>
      %29 = vector.shape_cast %28 : vector<1x1x128xf32> to vector<1x128xf32>
      %30 = vector.broadcast %29 : vector<1x128xf32> to vector<128x128xf32>
      %31 = arith.addf %27, %30 : vector<128x128xf32>
      %c0_28 = arith.constant 0 : index
      %c0_29 = arith.constant 0 : index
      %32 = vector.load %arg15[%c0_28, %c0_29] : memref<128x128xf32, #tpu.memory_space<vmem>>, vector<128x128xf32>
      tpu.vector_store %arg15[%c0_28, %c0_29], %31 {strides = array<i32>} : memref<128x128xf32, #tpu.memory_space<vmem>>, vector<128x128xf32>,
    } else {
    }
    %c0 = arith.constant 0 : index
    %c0_1 = arith.constant 0 : index
    %3 = vector.load %arg14[%c0, %c0_1] : memref<128x128xf32, #tpu.memory_space<vmem>>, vector<128x128xf32>
    %c0_2 = arith.constant 0 : index
    %c0_3 = arith.constant 0 : index
    %c0_4 = arith.constant 0 : index
    %c0_5 = arith.constant 0 : index
    %4 = vector.load %arg6[%c0_2, %c0_3, %c0_4, %c0_5] : memref<1x1x128x128xf32, #tpu.memory_space<vmem>>, vector<1x1x128x128xf32>
    %5 = vector.shape_cast %4 : vector<1x1x128x128xf32> to vector<128x128xf32>
    %cst = arith.constant dense<0.000000e+00> : vector<128x128xf32>
    %6 = tpu.matmul %3, %5, %cst {dimension_numbers = #tpu.dot_dimension_numbers<[1], [0], [0], [1], [0, 0, 1, 1], [], []>} : vector<128x128xf32>, vector<128x128xf32>, vector<128x128xf32> -> vector<128x128xf32>
    %c0_6 = arith.constant 0 : index
    %c0_7 = arith.constant 0 : index
    %7 = vector.load %arg15[%c0_6, %c0_7] : memref<128x128xf32, #tpu.memory_space<vmem>>, vector<128x128xf32>
    %c0_8 = arith.constant 0 : index
    %c0_9 = arith.constant 0 : index
    %c0_10 = arith.constant 0 : index
    %8 = vector.load %arg5[%c0_8, %c0_9, %c0_10] : memref<1x128x128xf32, #tpu.memory_space<vmem>>, vector<1x128x128xf32>
    %9 = vector.shape_cast %8 : vector<1x128x128xf32> to vector<128x128xf32>
    %cst_11 = arith.constant dense<0.000000e+00> : vector<128x128xf32>
    %10 = tpu.matmul %9, %6, %cst_11 {dimension_numbers = #tpu.dot_dimension_numbers<[1], [0], [0], [1], [0, 0, 1, 1], [], []>} : vector<128x128xf32>, vector<128x128xf32>, vector<128x128xf32> -> vector<128x128xf32>
    %11 = arith.addf %7, %10 : vector<128x128xf32>
    %c0_12 = arith.constant 0 : index
    %c0_13 = arith.constant 0 : index
    %12 = vector.load %arg15[%c0_12, %c0_13] : memref<128x128xf32, #tpu.memory_space<vmem>>, vector<128x128xf32>
    tpu.vector_store %arg15[%c0_12, %c0_13], %11 {strides = array<i32>} : memref<128x128xf32, #tpu.memory_space<vmem>>, vector<128x128xf32>,
    %c1_i32 = arith.constant 1 : i32
    %13 = arith.cmpi eq, %arg0, %c1_i32 : i32
    %c2_i32 = arith.constant 2 : i32
    %14 = arith.cmpi eq, %arg1, %c2_i32 : i32
    %15 = arith.andi %13, %14 : i1
    %16 = arith.extui %15 : i1 to i32
    %c0_i32_14 = arith.constant 0 : i32
    %17 = arith.cmpi ne, %16, %c0_i32_14 : i32
    scf.if %17 {
      %c0_15 = arith.constant 0 : index
      %c0_16 = arith.constant 0 : index
      %18 = vector.load %arg15[%c0_15, %c0_16] : memref<128x128xf32, #tpu.memory_space<vmem>>, vector<128x128xf32>
      %19 = tpu.transpose %18, [1, 0] : vector<128x128xf32> -> vector<128x128xf32>
      %c0_17 = arith.constant 0 : index
      %c0_18 = arith.constant 0 : index
      %20 = vector.load %arg10[%c0_17, %c0_18] : memref<128x128xf32, #tpu.memory_space<vmem>>, vector<128x128xf32>
      %cst_19 = arith.constant dense<0.000000e+00> : vector<128x128xf32>
      %21 = tpu.matmul %19, %20, %cst_19 {dimension_numbers = #tpu.dot_dimension_numbers<[1], [0], [0], [1], [0, 0, 1, 1], [], []>} : vector<128x128xf32>, vector<128x128xf32>, vector<128x128xf32> -> vector<128x128xf32>
      %c0_20 = arith.constant 0 : index
      %c0_21 = arith.constant 0 : index
      %22 = vector.load %arg11[%c0_20, %c0_21] : memref<128x128xf32, #tpu.memory_space<vmem>>, vector<128x128xf32>
      %cst_22 = arith.constant dense<0.000000e+00> : vector<128x128xf32>
      %23 = tpu.matmul %19, %22, %cst_22 {dimension_numbers = #tpu.dot_dimension_numbers<[1], [0], [0], [1], [0, 0, 1, 1], [], []>} : vector<128x128xf32>, vector<128x128xf32>, vector<128x128xf32> -> vector<128x128xf32>
      %c0_23 = arith.constant 0 : index
      %c0_24 = arith.constant 0 : index
      %24 = vector.load %arg9[%c0_23, %c0_24] : memref<128x3xf32, #tpu.memory_space<vmem>>, vector<128x3xf32>
      %c0_25 = arith.constant 0 : index
      %c0_26 = arith.constant 0 : index
      %25 = vector.load %arg12[%c0_25, %c0_26] : memref<3x128xf32, #tpu.memory_space<vmem>>, vector<3x128xf32>
      %cst_27 = arith.constant dense<0.000000e+00> : vector<128x128xf32>
      %26 = tpu.matmul %24, %25, %cst_27 {dimension_numbers = #tpu.dot_dimension_numbers<[1], [0], [0], [1], [0, 0, 1, 1], [], []>} : vector<128x3xf32>, vector<3x128xf32>, vector<128x128xf32> -> vector<128x128xf32>
      %27 = arith.mulf %21, %26 : vector<128x128xf32>
      %28 = arith.mulf %27, %23 : vector<128x128xf32>
      %cst_28 = arith.constant dense<0.000000e+00> : vector<128xf32>
      %29 = vector.multi_reduction <add>, %28, %cst_28 [0] : vector<128x128xf32> to vector<128xf32>
      %30 = vector.shape_cast %29 : vector<128xf32> to vector<1x128xf32>
      %c0_29 = arith.constant 0 : index
      %c0_30 = arith.constant 0 : index
      %31 = vector.load %arg13[%c0_29, %c0_30] : memref<1x128xf32, #tpu.memory_space<vmem>>, vector<1x128xf32>
      tpu.vector_store %arg13[%c0_29, %c0_30], %30 {strides = array<i32>} : memref<1x128xf32, #tpu.memory_space<vmem>>, vector<1x128xf32>,
    } else {
    }
    return
  }
  func.func @transform_0(%arg0: i32, %arg1: i32) -> (i32, i32) {
    %c0_i32 = arith.constant 0 : i32
    %c0_i32_0 = arith.constant 0 : i32
    %c0_i32_1 = arith.constant 0 : i32
    return %c0_i32, %c0_i32_0 : i32, i32
  }
  func.func @transform_1(%arg0: i32, %arg1: i32) -> (i32, i32) {
    %c0_i32 = arith.constant 0 : i32
    %c0_i32_0 = arith.constant 0 : i32
    %c0_i32_1 = arith.constant 0 : i32
    return %c0_i32, %c0_i32_0 : i32, i32
  }
  func.func @transform_2(%arg0: i32, %arg1: i32) -> (i32, i32) {
    %c0_i32 = arith.constant 0 : i32
    %c0_i32_0 = arith.constant 0 : i32
    %c0_i32_1 = arith.constant 0 : i32
    return %c0_i32, %c0_i32_0 : i32, i32
  }
  func.func @transform_3(%arg0: i32, %arg1: i32) -> (i32, i32, i32) {
    %c0_i32 = arith.constant 0 : i32
    %c0_i32_0 = arith.constant 0 : i32
    %c0_i32_1 = arith.constant 0 : i32
    return %arg1, %c0_i32, %c0_i32_0 : i32, i32, i32
  }
  func.func @transform_4(%arg0: i32, %arg1: i32) -> (i32, i32, i32, i32) {
    %c0_i32 = arith.constant 0 : i32
    %c0_i32_0 = arith.constant 0 : i32
    %c0_i32_1 = arith.constant 0 : i32
    return %arg0, %arg1, %c0_i32, %c0_i32_0 : i32, i32, i32, i32
  }
  func.func @transform_5(%arg0: i32, %arg1: i32) -> (i32, i32, i32) {
    %c0_i32 = arith.constant 0 : i32
    %c0_i32_0 = arith.constant 0 : i32
    %c0_i32_1 = arith.constant 0 : i32
    return %arg0, %c0_i32, %c0_i32_0 : i32, i32, i32
  }
  func.func @transform_6(%arg0: i32, %arg1: i32) -> (i32, i32, i32) {
    %c0_i32 = arith.constant 0 : i32
    %c0_i32_0 = arith.constant 0 : i32
    %c0_i32_1 = arith.constant 0 : i32
    return %arg0, %c0_i32, %c0_i32_0 : i32, i32, i32
  }
  func.func @transform_7(%arg0: i32, %arg1: i32) -> (i32, i32) {
    %c0_i32 = arith.constant 0 : i32
    %c0_i32_0 = arith.constant 0 : i32
    %c0_i32_1 = arith.constant 0 : i32
    return %c0_i32, %c0_i32_0 : i32, i32
  }
  func.func @transform_8(%arg0: i32, %arg1: i32) -> (i32, i32) {
    %c0_i32 = arith.constant 0 : i32
    %c0_i32_0 = arith.constant 0 : i32
    %c0_i32_1 = arith.constant 0 : i32
    return %c0_i32, %c0_i32_0 : i32, i32
  }
  func.func @transform_9(%arg0: i32, %arg1: i32) -> (i32, i32) {
    %c0_i32 = arith.constant 0 : i32
    %c0_i32_0 = arith.constant 0 : i32
    %c0_i32_1 = arith.constant 0 : i32
    return %c0_i32, %c0_i32_0 : i32, i32
  }
  func.func @transform_10(%arg0: i32, %arg1: i32) -> (i32, i32) {
    %c0_i32 = arith.constant 0 : i32
    %c0_i32_0 = arith.constant 0 : i32
    %c0_i32_1 = arith.constant 0 : i32
    return %c0_i32, %c0_i32_0 : i32, i32
  }
  func.func @transform_11(%arg0: i32, %arg1: i32) -> (i32, i32) {
    %c0_i32 = arith.constant 0 : i32
    %c0_i32_0 = arith.constant 0 : i32
    %c0_i32_1 = arith.constant 0 : i32
    return %c0_i32, %c0_i32_0 : i32, i32
  }
}

</mosaic_0001>

<llo_original>
// kernel: rgcn_link_prediction_forward.1
$region0: #{rgcn_link_prediction_forward.1}
  #allocation0 [shape = 'u32[]', space=smem, size = 0x4, offset = 0x4, fixed_abs, tag = 'smem constant byte address 0x4 - core index']
  #allocation1 [shape = 'u32[72,128]{1,0:T(1,128)}', space=vmem, size = 0x9000, scoped, tag = 'internal scratch']
  #allocation2 [shape = 'f32[128,128]{1,0:T(8,128)}', space=vmem, size = 0x10000, scoped, tag = 'scratch operand']
  #allocation3 [shape = 'f32[128,128]{1,0:T(8,128)}', space=vmem, size = 0x10000, scoped, tag = 'scratch operand']
  %s0 = inlined_call_operand.vmem [shape: f32[128,128], index: 0, kind: input, shape index: {}]
  %s1 = inlined_call_operand.vmem [shape: f32[128,128], index: 1, kind: input, shape index: {}]
  %s2 = inlined_call_operand.vmem [shape: f32[1,128], index: 2, kind: input, shape index: {}]
  %s3 = inlined_call_operand.vmem [shape: f32[3,128,128], index: 3, kind: input, shape index: {}]
  %s4 = inlined_call_operand.vmem [shape: f32[2,3,128,128], index: 4, kind: input, shape index: {}]
  %s5 = inlined_call_operand.vmem [shape: f32[2,128,128], index: 5, kind: input, shape index: {}]
  %s6 = inlined_call_operand.vmem [shape: f32[2,1,128], index: 6, kind: input, shape index: {}]
  %s7 = inlined_call_operand.vmem [shape: f32[128,3], index: 7, kind: input, shape index: {}]
  %s8 = inlined_call_operand.vmem [shape: f32[128,128], index: 8, kind: input, shape index: {}]
  %s9 = inlined_call_operand.vmem [shape: f32[128,128], index: 9, kind: input, shape index: {}]
  %s10 = inlined_call_operand.vmem [shape: f32[3,128], index: 10, kind: input, shape index: {}]
  %s11 = inlined_call_operand.vmem [shape: f32[1,128], index: 11, kind: output, shape index: {}]
  %s12 = sld [smem:[#allocation0]]
  $region93: #{rgcn_link_prediction_forward.1} parent=0
    _
  %s14 = ssub.s32 1, %s12
  %s15 = scalar_select 0, %s14, %s12
  loop: start=0, step=1, limit=8
  $region2: #{rgcn_link_prediction_forward.1} parent=0 // loop_pre_header
    _
  $region3: #{rgcn_link_prediction_forward.1} parent=0 // loop_header
    %s17 = sphi 0, %s21
    %p18 = scmp.ge.s32.totalorder %s17, 8
    %s24 = sphi 0, %s36
    %s25 = sphi 0, %s32
    %s26 = sphi 0, %s24
    %s27 = sphi 0, %s25
    %s28 = sphi 0, %s26
    %s29 = sphi 0, %s27
    %s37 = sphi 0, %s37
    %s39 = sphi 0, %s37
    %s40 = sphi 0, %s39
    %s54 = sphi 0, %s40
    %s58 = sphi 0, %s58
    %s60 = sphi 0, %s58
    %s61 = sphi 0, %s60
    %s75 = sphi 0, %s61
    %s79 = sphi 0, %s79
    %s81 = sphi 0, %s79
    %s82 = sphi 0, %s81
    %s96 = sphi 0, %s82
    %s102 = sphi 0, %s104
    %s105 = sphi 0, %s102
    %s106 = sphi 0, %s105
    %s122 = sphi 0, %s106
    %s130 = sphi 0, %s132
    %s133 = sphi 0, %s130
    %s134 = sphi 0, %s133
    %s150 = sphi 0, %s134
    %s156 = sphi 0, %s158
    %s159 = sphi 0, %s156
    %s160 = sphi 0, %s159
    %s176 = sphi 0, %s160
    %s182 = sphi 0, %s184
    %s185 = sphi 0, %s182
    %s186 = sphi 0, %s185
    %s202 = sphi 0, %s186
    %s206 = sphi 0, %s206
    %s208 = sphi 0, %s206
    %s209 = sphi 0, %s208
    %s223 = sphi 0, %s209
    %s227 = sphi 0, %s227
    %s229 = sphi 0, %s227
    %s230 = sphi 0, %s229
    %s244 = sphi 0, %s230
    %s248 = sphi 0, %s248
    %s250 = sphi 0, %s248
    %s251 = sphi 0, %s250
    %s265 = sphi 0, %s251
    %s269 = sphi 0, %s269
    %s271 = sphi 0, %s269
    %s272 = sphi 0, %s271
    %s286 = sphi 0, %s272
    %s290 = sphi 0, %s290
    %s292 = sphi 0, %s290
    %s293 = sphi 0, %s292
    %s307 = sphi 0, %s293
  $region4: #{rgcn_link_prediction_forward.1} parent=0 // loop_header_branch
    %20 = sbr.rel (%p18) target = $region8
  $region5: #{rgcn_link_prediction_forward.1} parent=0 // loop_body
    %s22 = ssub.s32 %s17, 1
    %s23 = ssub.s32 %s17, 2
    %s30 = sadd.s32 1, %s25
    %p31 = scmp.ge.s32.totalorder %s30, 3
    %s32 = scalar_select %p31, 0, %s30
    %s33 = sadd.s32 1, %s24
    %s34 = scalar_select %p31, %s33, %s24
    %p35 = scmp.ge.s32.totalorder %s34, 2
    %s36 = scalar_select %p35, 0, %s34
    %s38 = sadd.s32 %s37, 1
    %p41 = scmp.eq.s32.totalorder %s17, 5
    %p42 = scmp.ne.s32.totalorder %s37, %s39
    %p43 = scmp.eq.s32.totalorder %s17, 0
    %p44 = por %p42, %p43
    %p45 = scmp.ne.s32.totalorder %s37, %s39
    %p46 = scmp.eq.s32.totalorder %s22, 5
    %p47 = por %p45, %p46
    %p48 = scmp.ne.s32.totalorder %s39, %s40
    %p49 = scmp.eq.s32.totalorder %s22, 0
    %p50 = por %p48, %p49
    %p51 = scmp.ne.s32.totalorder %s39, %s40
    %p52 = scmp.eq.s32.totalorder %s23, 5
    %p53 = por %p51, %p52
    %p55 = scmp.ne.s32.totalorder %s40, %s54
    %p56 = scmp.eq.s32.totalorder %s23, 0
    %p57 = por %p55, %p56
    %s59 = sadd.s32 %s58, 1
    %p62 = scmp.eq.s32.totalorder %s17, 5
    %p63 = scmp.ne.s32.totalorder %s58, %s60
    %p64 = scmp.eq.s32.totalorder %s17, 0
    %p65 = por %p63, %p64
    %p66 = scmp.ne.s32.totalorder %s58, %s60
    %p67 = scmp.eq.s32.totalorder %s22, 5
    %p68 = por %p66, %p67
    %p69 = scmp.ne.s32.totalorder %s60, %s61
    %p70 = scmp.eq.s32.totalorder %s22, 0
    %p71 = por %p69, %p70
    %p72 = scmp.ne.s32.totalorder %s60, %s61
    %p73 = scmp.eq.s32.totalorder %s23, 5
    %p74 = por %p72, %p73
    %p76 = scmp.ne.s32.totalorder %s61, %s75
    %p77 = scmp.eq.s32.totalorder %s23, 0
    %p78 = por %p76, %p77
    %s80 = sadd.s32 %s79, 1
    %p83 = scmp.eq.s32.totalorder %s17, 5
    %p84 = scmp.ne.s32.totalorder %s79, %s81
    %p85 = scmp.eq.s32.totalorder %s17, 0
    %p86 = por %p84, %p85
    %p87 = scmp.ne.s32.totalorder %s79, %s81
    %p88 = scmp.eq.s32.totalorder %s22, 5
    %p89 = por %p87, %p88
    %p90 = scmp.ne.s32.totalorder %s81, %s82
    %p91 = scmp.eq.s32.totalorder %s22, 0
    %p92 = por %p90, %p91
    %p93 = scmp.ne.s32.totalorder %s81, %s82
    %p94 = scmp.eq.s32.totalorder %s23, 5
    %p95 = por %p93, %p94
    %p97 = scmp.ne.s32.totalorder %s82, %s96
    %p98 = scmp.eq.s32.totalorder %s23, 0
    %p99 = por %p97, %p98
    %s100 = ssub.s32 %s25, %s32
    %p101 = scmp.eq.s32.totalorder %s100, 0
    %s103 = sadd.s32 %s102, 1
    %s104 = scalar_select %p101, %s102, %s103
    %p107 = pneg %p101
    %p108 = scmp.eq.s32.totalorder %s17, 5
    %p109 = por %p107, %p108
    %p110 = scmp.ne.s32.totalorder %s102, %s105
    %p111 = scmp.eq.s32.totalorder %s17, 0
    %p112 = por %p110, %p111
    %p113 = scmp.ne.s32.totalorder %s102, %s105
    %p114 = scmp.eq.s32.totalorder %s22, 5
    %p115 = por %p113, %p114
    %p116 = scmp.ne.s32.totalorder %s105, %s106
    %p117 = scmp.eq.s32.totalorder %s22, 0
    %p118 = por %p116, %p117
    %p119 = scmp.ne.s32.totalorder %s105, %s106
    %p120 = scmp.eq.s32.totalorder %s23, 5
    %p121 = por %p119, %p120
    %p123 = scmp.ne.s32.totalorder %s106, %s122
    %p124 = scmp.eq.s32.totalorder %s23, 0
    %p125 = por %p123, %p124
    %s126 = ssub.s32 %s24, %s36
    %s127 = ssub.s32 %s25, %s32
    %s128 = sor.u32 %s126, %s127
    %p129 = scmp.eq.s32.totalorder %s128, 0
    %s131 = sadd.s32 %s130, 1
    %s132 = scalar_select %p129, %s130, %s131
    %p135 = pneg %p129
    %p136 = scmp.eq.s32.totalorder %s17, 5
    %p137 = por %p135, %p136
    %p138 = scmp.ne.s32.totalorder %s130, %s133
    %p139 = scmp.eq.s32.totalorder %s17, 0
    %p140 = por %p138, %p139
    %p141 = scmp.ne.s32.totalorder %s130, %s133
    %p142 = scmp.eq.s32.totalorder %s22, 5
    %p143 = por %p141, %p142
    %p144 = scmp.ne.s32.totalorder %s133, %s134
    %p145 = scmp.eq.s32.totalorder %s22, 0
    %p146 = por %p144, %p145
    %p147 = scmp.ne.s32.totalorder %s133, %s134
    %p148 = scmp.eq.s32.totalorder %s23, 5
    %p149 = por %p147, %p148
    %p151 = scmp.ne.s32.totalorder %s134, %s150
    %p152 = scmp.eq.s32.totalorder %s23, 0
    %p153 = por %p151, %p152
    %s154 = ssub.s32 %s24, %s36
    %p155 = scmp.eq.s32.totalorder %s154, 0
    %s157 = sadd.s32 %s156, 1
    %s158 = scalar_select %p155, %s156, %s157
    %p161 = pneg %p155
    %p162 = scmp.eq.s32.totalorder %s17, 5
    %p163 = por %p161, %p162
    %p164 = scmp.ne.s32.totalorder %s156, %s159
    %p165 = scmp.eq.s32.totalorder %s17, 0
    %p166 = por %p164, %p165
    %p167 = scmp.ne.s32.totalorder %s156, %s159
    %p168 = scmp.eq.s32.totalorder %s22, 5
    %p169 = por %p167, %p168
    %p170 = scmp.ne.s32.totalorder %s159, %s160
    %p171 = scmp.eq.s32.totalorder %s22, 0
    %p172 = por %p170, %p171
    %p173 = scmp.ne.s32.totalorder %s159, %s160
    %p174 = scmp.eq.s32.totalorder %s23, 5
    %p175 = por %p173, %p174
    %p177 = scmp.ne.s32.totalorder %s160, %s176
    %p178 = scmp.eq.s32.totalorder %s23, 0
    %p179 = por %p177, %p178
    %s180 = ssub.s32 %s24, %s36
    %p181 = scmp.eq.s32.totalorder %s180, 0
    %s183 = sadd.s32 %s182, 1
    %s184 = scalar_select %p181, %s182, %s183
    %p187 = pneg %p181
    %p188 = scmp.eq.s32.totalorder %s17, 5
    %p189 = por %p187, %p188
    %p190 = scmp.ne.s32.totalorder %s182, %s185
    %p191 = scmp.eq.s32.totalorder %s17, 0
    %p192 = por %p190, %p191
    %p193 = scmp.ne.s32.totalorder %s182, %s185
    %p194 = scmp.eq.s32.totalorder %s22, 5
    %p195 = por %p193, %p194
    %p196 = scmp.ne.s32.totalorder %s185, %s186
    %p197 = scmp.eq.s32.totalorder %s22, 0
    %p198 = por %p196, %p197
    %p199 = scmp.ne.s32.totalorder %s185, %s186
    %p200 = scmp.eq.s32.totalorder %s23, 5
    %p201 = por %p199, %p200
    %p203 = scmp.ne.s32.totalorder %s186, %s202
    %p204 = scmp.eq.s32.totalorder %s23, 0
    %p205 = por %p203, %p204
    %s207 = sadd.s32 %s206, 1
    %p210 = scmp.eq.s32.totalorder %s17, 5
    %p211 = scmp.ne.s32.totalorder %s206, %s208
    %p212 = scmp.eq.s32.totalorder %s17, 0
    %p213 = por %p211, %p212
    %p214 = scmp.ne.s32.totalorder %s206, %s208
    %p215 = scmp.eq.s32.totalorder %s22, 5
    %p216 = por %p214, %p215
    %p217 = scmp.ne.s32.totalorder %s208, %s209
    %p218 = scmp.eq.s32.totalorder %s22, 0
    %p219 = por %p217, %p218
    %p220 = scmp.ne.s32.totalorder %s208, %s209
    %p221 = scmp.eq.s32.totalorder %s23, 5
    %p222 = por %p220, %p221
    %p224 = scmp.ne.s32.totalorder %s209, %s223
    %p225 = scmp.eq.s32.totalorder %s23, 0
    %p226 = por %p224, %p225
    %s228 = sadd.s32 %s227, 1
    %p231 = scmp.eq.s32.totalorder %s17, 5
    %p232 = scmp.ne.s32.totalorder %s227, %s229
    %p233 = scmp.eq.s32.totalorder %s17, 0
    %p234 = por %p232, %p233
    %p235 = scmp.ne.s32.totalorder %s227, %s229
    %p236 = scmp.eq.s32.totalorder %s22, 5
    %p237 = por %p235, %p236
    %p238 = scmp.ne.s32.totalorder %s229, %s230
    %p239 = scmp.eq.s32.totalorder %s22, 0
    %p240 = por %p238, %p239
    %p241 = scmp.ne.s32.totalorder %s229, %s230
    %p242 = scmp.eq.s32.totalorder %s23, 5
    %p243 = por %p241, %p242
    %p245 = scmp.ne.s32.totalorder %s230, %s244
    %p246 = scmp.eq.s32.totalorder %s23, 0
    %p247 = por %p245, %p246
    %s249 = sadd.s32 %s248, 1
    %p252 = scmp.eq.s32.totalorder %s17, 5
    %p253 = scmp.ne.s32.totalorder %s248, %s250
    %p254 = scmp.eq.s32.totalorder %s17, 0
    %p255 = por %p253, %p254
    %p256 = scmp.ne.s32.totalorder %s248, %s250
    %p257 = scmp.eq.s32.totalorder %s22, 5
    %p258 = por %p256, %p257
    %p259 = scmp.ne.s32.totalorder %s250, %s251
    %p260 = scmp.eq.s32.totalorder %s22, 0
    %p261 = por %p259, %p260
    %p262 = scmp.ne.s32.totalorder %s250, %s251
    %p263 = scmp.eq.s32.totalorder %s23, 5
    %p264 = por %p262, %p263
    %p266 = scmp.ne.s32.totalorder %s251, %s265
    %p267 = scmp.eq.s32.totalorder %s23, 0
    %p268 = por %p266, %p267
    %s270 = sadd.s32 %s269, 1
    %p273 = scmp.eq.s32.totalorder %s17, 5
    %p274 = scmp.ne.s32.totalorder %s269, %s271
    %p275 = scmp.eq.s32.totalorder %s17, 0
    %p276 = por %p274, %p275
    %p277 = scmp.ne.s32.totalorder %s269, %s271
    %p278 = scmp.eq.s32.totalorder %s22, 5
    %p279 = por %p277, %p278
    %p280 = scmp.ne.s32.totalorder %s271, %s272
    %p281 = scmp.eq.s32.totalorder %s22, 0
    %p282 = por %p280, %p281
    %p283 = scmp.ne.s32.totalorder %s271, %s272
    %p284 = scmp.eq.s32.totalorder %s23, 5
    %p285 = por %p283, %p284
    %p287 = scmp.ne.s32.totalorder %s272, %s286
    %p288 = scmp.eq.s32.totalorder %s23, 0
    %p289 = por %p287, %p288
    %s291 = sadd.s32 %s290, 1
    %p294 = scmp.eq.s32.totalorder %s17, 5
    %p295 = scmp.ne.s32.totalorder %s290, %s292
    %p296 = scmp.eq.s32.totalorder %s17, 0
    %p297 = por %p295, %p296
    %p298 = scmp.ne.s32.totalorder %s290, %s292
    %p299 = scmp.eq.s32.totalorder %s22, 5
    %p300 = por %p298, %p299
    %p301 = scmp.ne.s32.totalorder %s292, %s293
    %p302 = scmp.eq.s32.totalorder %s22, 0
    %p303 = por %p301, %p302
    %p304 = scmp.ne.s32.totalorder %s292, %s293
    %p305 = scmp.eq.s32.totalorder %s23, 5
    %p306 = por %p304, %p305
    %p308 = scmp.ne.s32.totalorder %s293, %s307
    %p309 = scmp.eq.s32.totalorder %s23, 0
    %p310 = por %p308, %p309
    %p311 = scmp.le.s32.totalorder 1, %s17
    %p312 = scmp.lt.s32.totalorder %s17, 7
    %p313 = pnand %p311, %p312
    %p314 = pneg %p313
    // Predicated region
    $region9: #{rgcn_link_prediction_forward.1} parent=5 // pred_check
      _
    $region10: #{rgcn_link_prediction_forward.1} parent=5 // pred_check_branch
      %316 = sbr.rel (%p313) target = $region12
    $region11: #{rgcn_link_prediction_forward.1} parent=5 // pred_region
      %s317 = ssub.s32 %s17, 1
      // Predicated region
      $region13: #{rgcn_link_prediction_forward.1} parent=11 // pred_check
        %p318 = pneg %p50
      $region14: #{rgcn_link_prediction_forward.1} parent=11 // pred_check_branch
        %320 = sbr.rel (%p318) target = $region16
      $region15: #{rgcn_link_prediction_forward.1} parent=11 // pred_region
        _
      $region16: #{rgcn_link_prediction_forward.1} parent=11 // pred_fallthru
        _
      // Predicated region
      $region17: #{rgcn_link_prediction_forward.1} parent=11 // pred_check
        %p321 = pneg %p71
      $region18: #{rgcn_link_prediction_forward.1} parent=11 // pred_check_branch
        %323 = sbr.rel (%p321) target = $region20
      $region19: #{rgcn_link_prediction_forward.1} parent=11 // pred_region
        _
      $region20: #{rgcn_link_prediction_forward.1} parent=11 // pred_fallthru
        _
      // Predicated region
      $region21: #{rgcn_link_prediction_forward.1} parent=11 // pred_check
        %p324 = pneg %p92
      $region22: #{rgcn_link_prediction_forward.1} parent=11 // pred_check_branch
        %326 = sbr.rel (%p324) target = $region24
      $region23: #{rgcn_link_prediction_forward.1} parent=11 // pred_region
        _
      $region24: #{rgcn_link_prediction_forward.1} parent=11 // pred_fallthru
        _
      // Predicated region
      $region25: #{rgcn_link_prediction_forward.1} parent=11 // pred_check
        %p327 = pneg %p219
      $region26: #{rgcn_link_prediction_forward.1} parent=11 // pred_check_branch
        %329 = sbr.rel (%p327) target = $region28
      $region27: #{rgcn_link_prediction_forward.1} parent=11 // pred_region
        _
      $region28: #{rgcn_link_prediction_forward.1} parent=11 // pred_fallthru
        _
      // Predicated region
      $region29: #{rgcn_link_prediction_forward.1} parent=11 // pred_check
        %p330 = pneg %p240
      $region30: #{rgcn_link_prediction_forward.1} parent=11 // pred_check_branch
        %332 = sbr.rel (%p330) target = $region32
      $region31: #{rgcn_link_prediction_forward.1} parent=11 // pred_region
        _
      $region32: #{rgcn_link_prediction_forward.1} parent=11 // pred_fallthru
        _
      // Predicated region
      $region33: #{rgcn_link_prediction_forward.1} parent=11 // pred_check
        %p333 = pneg %p261
      $region34: #{rgcn_link_prediction_forward.1} parent=11 // pred_check_branch
        %335 = sbr.rel (%p333) target = $region36
      $region35: #{rgcn_link_prediction_forward.1} parent=11 // pred_region
        _
      $region36: #{rgcn_link_prediction_forward.1} parent=11 // pred_fallthru
        _
      // Predicated region
      $region37: #{rgcn_link_prediction_forward.1} parent=11 // pred_check
        %p336 = pneg %p282
      $region38: #{rgcn_link_prediction_forward.1} parent=11 // pred_check_branch
        %338 = sbr.rel (%p336) target = $region40
      $region39: #{rgcn_link_prediction_forward.1} parent=11 // pred_region
        _
      $region40: #{rgcn_link_prediction_forward.1} parent=11 // pred_fallthru
        _
    $region12: #{rgcn_link_prediction_forward.1} parent=5 // pred_fallthru
      _
    %p339 = scmp.lt.s32.totalorder %s17, 6
    // Predicated region
    $region41: #{rgcn_link_prediction_forward.1} parent=5 // pred_check
      %p340 = pneg %p339
    $region42: #{rgcn_link_prediction_forward.1} parent=5 // pred_check_branch
      %342 = sbr.rel (%p340) target = $region44
    $region43: #{rgcn_link_prediction_forward.1} parent=5 // pred_region
      // Predicated region
      $region45: #{rgcn_link_prediction_forward.1} parent=43 // pred_check
        %p343 = pneg %p112
      $region46: #{rgcn_link_prediction_forward.1} parent=43 // pred_check_branch
        %345 = sbr.rel (%p343) target = $region48
      $region47: #{rgcn_link_prediction_forward.1} parent=43 // pred_region
        %p346 = scmp.lt.s32.totalorder %s25, 2
        %s347 = scalar_select %p346, %s25, 2
        %s348 = smul.addr %s347, 16
        %s349 = smul.addr %s348, 8
        %s350 = scalar_lea.vmem %s3, %s349
      $region48: #{rgcn_link_prediction_forward.1} parent=43 // pred_fallthru
        _
      // Predicated region
      $region49: #{rgcn_link_prediction_forward.1} parent=43 // pred_check
        %p351 = pneg %p140
      $region50: #{rgcn_link_prediction_forward.1} parent=43 // pred_check_branch
        %353 = sbr.rel (%p351) target = $region52
      $region51: #{rgcn_link_prediction_forward.1} parent=43 // pred_region
        %p354 = scmp.lt.s32.totalorder %s24, 1
        %s355 = scalar_select %p354, %s24, 1
        %p356 = scmp.lt.s32.totalorder %s25, 2
        %s357 = scalar_select %p356, %s25, 2
        %s358 = smul.addr %s357, 16
        %s359 = smul.addr %s355, 48
        %s360 = sadd.s32 %s358, %s359
        %s361 = smul.addr %s360, 8
        %s362 = scalar_lea.vmem %s4, %s361
      $region52: #{rgcn_link_prediction_forward.1} parent=43 // pred_fallthru
        _
      // Predicated region
      $region53: #{rgcn_link_prediction_forward.1} parent=43 // pred_check
        %p363 = pneg %p166
      $region54: #{rgcn_link_prediction_forward.1} parent=43 // pred_check_branch
        %365 = sbr.rel (%p363) target = $region56
      $region55: #{rgcn_link_prediction_forward.1} parent=43 // pred_region
        %p366 = scmp.lt.s32.totalorder %s24, 1
        %s367 = scalar_select %p366, %s24, 1
        %s368 = smul.addr %s367, 16
        %s369 = smul.addr %s368, 8
        %s370 = scalar_lea.vmem %s5, %s369
      $region56: #{rgcn_link_prediction_forward.1} parent=43 // pred_fallthru
        _
      // Predicated region
      $region57: #{rgcn_link_prediction_forward.1} parent=43 // pred_check
        %p371 = pneg %p192
      $region58: #{rgcn_link_prediction_forward.1} parent=43 // pred_check_branch
        %373 = sbr.rel (%p371) target = $region60
      $region59: #{rgcn_link_prediction_forward.1} parent=43 // pred_region
        %p374 = scmp.lt.s32.totalorder %s24, 1
        %s375 = scalar_select %p374, %s24, 1
        %s376 = scalar_lea.vmem %s6, %s375
      $region60: #{rgcn_link_prediction_forward.1} parent=43 // pred_fallthru
        _
    $region44: #{rgcn_link_prediction_forward.1} parent=5 // pred_fallthru
      _
    %p377 = scmp.le.s32.totalorder 1, %s17
    %p378 = scmp.lt.s32.totalorder %s17, 7
    %p379 = pnand %p377, %p378
    %p380 = pneg %p379
    // Predicated region
    $region61: #{rgcn_link_prediction_forward.1} parent=5 // pred_check
      _
    $region62: #{rgcn_link_prediction_forward.1} parent=5 // pred_check_branch
      %382 = sbr.rel (%p379) target = $region64
    $region63: #{rgcn_link_prediction_forward.1} parent=5 // pred_region
      %s383 = ssub.s32 %s17, 1
      %p384 = pneg %p50
      %p385 = pneg %p47
      %p386 = pneg %p71
      %p387 = pneg %p68
      %p388 = pneg %p92
      %p389 = pneg %p89
      %p390 = scmp.lt.s32.totalorder %s27, 2
      %s391 = scalar_select %p390, %s27, 2
      %s392 = smul.addr %s391, 16
      %s393 = smul.addr %s392, 8
      %s394 = scalar_lea.vmem %s3, %s393
      %p395 = pneg %p118
      %p396 = pneg %p115
      %p397 = scmp.lt.s32.totalorder %s26, 1
      %s398 = scalar_select %p397, %s26, 1
      %p399 = scmp.lt.s32.totalorder %s27, 2
      %s400 = scalar_select %p399, %s27, 2
      %s401 = smul.addr %s400, 16
      %s402 = smul.addr %s398, 48
      %s403 = sadd.s32 %s401, %s402
      %s404 = smul.addr %s403, 8
      %s405 = scalar_lea.vmem %s4, %s404
      %p406 = pneg %p146
      %p407 = pneg %p143
      %p408 = scmp.lt.s32.totalorder %s26, 1
      %s409 = scalar_select %p408, %s26, 1
      %s410 = smul.addr %s409, 16
      %s411 = smul.addr %s410, 8
      %s412 = scalar_lea.vmem %s5, %s411
      %p413 = pneg %p172
      %p414 = pneg %p169
      %p415 = scmp.lt.s32.totalorder %s26, 1
      %s416 = scalar_select %p415, %s26, 1
      %s417 = scalar_lea.vmem %s6, %s416
      %p418 = pneg %p198
      %p419 = pneg %p195
      %p420 = pneg %p219
      %p421 = pneg %p216
      %p422 = pneg %p240
      %p423 = pneg %p237
      %p424 = pneg %p261
      %p425 = pneg %p258
      %p426 = pneg %p282
      %p427 = pneg %p279
      %p428 = pneg %p303
      %p429 = pneg %p300
      %p430 = scmp.lt.s32.totalorder %s27, 2
      %s431 = scalar_select %p430, %s27, 2
      %s432 = smul.addr %s431, 16
      %s433 = smul.addr %s432, 8
      %s434 = scalar_lea.vmem %s3, %s433
      %p435 = scmp.lt.s32.totalorder %s26, 1
      %s436 = scalar_select %p435, %s26, 1
      %p437 = scmp.lt.s32.totalorder %s27, 2
      %s438 = scalar_select %p437, %s27, 2
      %s439 = smul.addr %s438, 16
      %s440 = smul.addr %s436, 48
      %s441 = sadd.s32 %s439, %s440
      %s442 = smul.addr %s441, 8
      %s443 = scalar_lea.vmem %s4, %s442
      %p444 = scmp.lt.s32.totalorder %s26, 1
      %s445 = scalar_select %p444, %s26, 1
      %s446 = smul.addr %s445, 16
      %s447 = smul.addr %s446, 8
      %s448 = scalar_lea.vmem %s5, %s447
      %p449 = scmp.lt.s32.totalorder %s26, 1
      %s450 = scalar_select %p449, %s26, 1
      %s451 = scalar_lea.vmem %s6, %s450
      %p452 = scmp.eq.s32.totalorder %s27, 0
      // Predicated region
      $region65: #{rgcn_link_prediction_forward.1} parent=63 // pred_check
        %p453 = pneg %p452
      $region66: #{rgcn_link_prediction_forward.1} parent=63 // pred_check_branch
        %455 = sbr.rel (%p453) target = $region68
      $region67: #{rgcn_link_prediction_forward.1} parent=63 // pred_region
        %p456 = scmp.eq.s32.totalorder %s26, 0
        // Predicated region
        $region69: #{rgcn_link_prediction_forward.1} parent=67 // pred_check
          %p457 = pneg %p456
        $region70: #{rgcn_link_prediction_forward.1} parent=67 // pred_check_branch
          %459 = sbr.rel (%p457) target = $region72
        $region71: #{rgcn_link_prediction_forward.1} parent=67 // pred_region
          %v460 = vld [vmem:[%s0] sm:$0xff]
          %v461 = vld [vmem:[%s0 + $0x8] sm:$0xff]
          %v462 = vld [vmem:[%s0 + $0x10] sm:$0xff]
          %v463 = vld [vmem:[%s0 + $0x18] sm:$0xff]
          %v464 = vld [vmem:[%s0 + $0x20] sm:$0xff]
          %v465 = vld [vmem:[%s0 + $0x28] sm:$0xff]
          %v466 = vld [vmem:[%s0 + $0x30] sm:$0xff]
          %v467 = vld [vmem:[%s0 + $0x38] sm:$0xff]
          %v468 = vld [vmem:[%s0 + $0x40] sm:$0xff]
          %v469 = vld [vmem:[%s0 + $0x48] sm:$0xff]
          %v470 = vld [vmem:[%s0 + $0x50] sm:$0xff]
          %v471 = vld [vmem:[%s0 + $0x58] sm:$0xff]
          %v472 = vld [vmem:[%s0 + $0x60] sm:$0xff]
          %v473 = vld [vmem:[%s0 + $0x68] sm:$0xff]
          %v474 = vld [vmem:[%s0 + $0x70] sm:$0xff]
          %v475 = vld [vmem:[%s0 + $0x78] sm:$0xff]
          %v476 = vld [vmem:[%s1] sm:$0xff]
          %v477 = vld [vmem:[%s1 + $0x8] sm:$0xff]
          %v478 = vld [vmem:[%s1 + $0x10] sm:$0xff]
          %v479 = vld [vmem:[%s1 + $0x18] sm:$0xff]
          %v480 = vld [vmem:[%s1 + $0x20] sm:$0xff]
          %v481 = vld [vmem:[%s1 + $0x28] sm:$0xff]
          %v482 = vld [vmem:[%s1 + $0x30] sm:$0xff]
          %v483 = vld [vmem:[%s1 + $0x38] sm:$0xff]
          %v484 = vld [vmem:[%s1 + $0x40] sm:$0xff]
          %v485 = vld [vmem:[%s1 + $0x48] sm:$0xff]
          %v486 = vld [vmem:[%s1 + $0x50] sm:$0xff]
          %v487 = vld [vmem:[%s1 + $0x58] sm:$0xff]
          %v488 = vld [vmem:[%s1 + $0x60] sm:$0xff]
          %v489 = vld [vmem:[%s1 + $0x68] sm:$0xff]
          %v490 = vld [vmem:[%s1 + $0x70] sm:$0xff]
          %v491 = vld [vmem:[%s1 + $0x78] sm:$0xff]
          %v492 = vld [vmem:[%s2] sm:$0x1]
          %v494 = vperm.slane %v492, 0
          %496 = vmatpush.msra.mxu0 %v491
          %497 = vmatpush.msra.mxu0 %v490
          %498 = vmatpush.msra.mxu0 %v489
          %499 = vmatpush.msra.mxu0 %v488
          %500 = vmatpush.msra.mxu0 %v487
          %501 = vmatpush.msra.mxu0 %v486
          %502 = vmatpush.msra.mxu0 %v485
          %503 = vmatpush.msra.mxu0 %v484
          %504 = vmatpush.msra.mxu0 %v483
          %505 = vmatpush.msra.mxu0 %v482
          %506 = vmatpush.msra.mxu0 %v481
          %507 = vmatpush.msra.mxu0 %v480
          %508 = vmatpush.msra.mxu0 %v479
          %509 = vmatpush.msra.mxu0 %v478
          %510 = vmatpush.msra.mxu0 %v477
          %511 = vmatpush.msra.mxu0 %v476
          %512 = vmatmul.f32.gmra.mxu0 %v460
          %v513 = vpop.f32.mrf.mxu0
          %v514 = vadd.f32 %v494, %v513
          %515 = vmatmul.f32.gmra.mxu0 %v461
          %v516 = vpop.f32.mrf.mxu0
          %v517 = vadd.f32 %v494, %v516
          %518 = vmatmul.f32.gmra.mxu0 %v462
          %v519 = vpop.f32.mrf.mxu0
          %v520 = vadd.f32 %v494, %v519
          %521 = vmatmul.f32.gmra.mxu0 %v463
          %v522 = vpop.f32.mrf.mxu0
          %v523 = vadd.f32 %v494, %v522
          %524 = vmatmul.f32.gmra.mxu0 %v464
          %v525 = vpop.f32.mrf.mxu0
          %v526 = vadd.f32 %v494, %v525
          %527 = vmatmul.f32.gmra.mxu0 %v465
          %v528 = vpop.f32.mrf.mxu0
          %v529 = vadd.f32 %v494, %v528
          %530 = vmatmul.f32.gmra.mxu0 %v466
          %v531 = vpop.f32.mrf.mxu0
          %v532 = vadd.f32 %v494, %v531
          %533 = vmatmul.f32.gmra.mxu0 %v467
          %v534 = vpop.f32.mrf.mxu0
          %v535 = vadd.f32 %v494, %v534
          %536 = vmatmul.f32.gmra.mxu0 %v468
          %v537 = vpop.f32.mrf.mxu0
          %v538 = vadd.f32 %v494, %v537
          %539 = vmatmul.f32.gmra.mxu0 %v469
          %v540 = vpop.f32.mrf.mxu0
          %v541 = vadd.f32 %v494, %v540
          %542 = vmatmul.f32.gmra.mxu0 %v470
          %v543 = vpop.f32.mrf.mxu0
          %v544 = vadd.f32 %v494, %v543
          %545 = vmatmul.f32.gmra.mxu0 %v471
          %v546 = vpop.f32.mrf.mxu0
          %v547 = vadd.f32 %v494, %v546
          %548 = vmatmul.f32.gmra.mxu0 %v472
          %v549 = vpop.f32.mrf.mxu0
          %v550 = vadd.f32 %v494, %v549
          %551 = vmatmul.f32.gmra.mxu0 %v473
          %v552 = vpop.f32.mrf.mxu0
          %v553 = vadd.f32 %v494, %v552
          %554 = vmatmul.f32.gmra.mxu0 %v474
          %v555 = vpop.f32.mrf.mxu0
          %v556 = vadd.f32 %v494, %v555
          %557 = vmatmul.f32.gmra.mxu0 %v475
          %v558 = vpop.f32.mrf.mxu0
          %v559 = vadd.f32 %v494, %v558
          %560 = vdwg.mxu0
          %v561 = vmax.f32 %v514, 0.0
          %v562 = vmax.f32 %v517, 0.0
          %v563 = vmax.f32 %v520, 0.0
          %v564 = vmax.f32 %v523, 0.0
          %v565 = vmax.f32 %v526, 0.0
          %v566 = vmax.f32 %v529, 0.0
          %v567 = vmax.f32 %v532, 0.0
          %v568 = vmax.f32 %v535, 0.0
          %v569 = vmax.f32 %v538, 0.0
          %v570 = vmax.f32 %v541, 0.0
          %v571 = vmax.f32 %v544, 0.0
          %v572 = vmax.f32 %v547, 0.0
          %v573 = vmax.f32 %v550, 0.0
          %v574 = vmax.f32 %v553, 0.0
          %v575 = vmax.f32 %v556, 0.0
          %v576 = vmax.f32 %v559, 0.0
          %577 = vst [vmem:[#allocation2] sm:$0xff] %v561
          %578 = vst [vmem:[#allocation2 + $0x8] sm:$0xff] %v562
          %579 = vst [vmem:[#allocation2 + $0x10] sm:$0xff] %v563
          %580 = vst [vmem:[#allocation2 + $0x18] sm:$0xff] %v564
          %581 = vst [vmem:[#allocation2 + $0x20] sm:$0xff] %v565
          %582 = vst [vmem:[#allocation2 + $0x28] sm:$0xff] %v566
          %583 = vst [vmem:[#allocation2 + $0x30] sm:$0xff] %v567
          %584 = vst [vmem:[#allocation2 + $0x38] sm:$0xff] %v568
          %585 = vst [vmem:[#allocation2 + $0x40] sm:$0xff] %v569
          %586 = vst [vmem:[#allocation2 + $0x48] sm:$0xff] %v570
          %587 = vst [vmem:[#allocation2 + $0x50] sm:$0xff] %v571
          %588 = vst [vmem:[#allocation2 + $0x58] sm:$0xff] %v572
          %589 = vst [vmem:[#allocation2 + $0x60] sm:$0xff] %v573
          %590 = vst [vmem:[#allocation2 + $0x68] sm:$0xff] %v574
          %591 = vst [vmem:[#allocation2 + $0x70] sm:$0xff] %v575
          %592 = vst [vmem:[#allocation2 + $0x78] sm:$0xff] %v576
        $region72: #{rgcn_link_prediction_forward.1} parent=67 // pred_fallthru
          _
        %p593 = scmp.gt.s32.totalorder %s26, 0
        // Predicated region
        $region73: #{rgcn_link_prediction_forward.1} parent=67 // pred_check
          %p594 = pneg %p593
        $region74: #{rgcn_link_prediction_forward.1} parent=67 // pred_check_branch
          %596 = sbr.rel (%p594) target = $region76
        $region75: #{rgcn_link_prediction_forward.1} parent=67 // pred_region
          %v597 = vld [vmem:[#allocation3] sm:$0xff]
          %v598 = vld [vmem:[#allocation3 + $0x8] sm:$0xff]
          %v599 = vld [vmem:[#allocation3 + $0x10] sm:$0xff]
          %v600 = vld [vmem:[#allocation3 + $0x18] sm:$0xff]
          %v601 = vld [vmem:[#allocation3 + $0x20] sm:$0xff]
          %v602 = vld [vmem:[#allocation3 + $0x28] sm:$0xff]
          %v603 = vld [vmem:[#allocation3 + $0x30] sm:$0xff]
          %v604 = vld [vmem:[#allocation3 + $0x38] sm:$0xff]
          %v605 = vld [vmem:[#allocation3 + $0x40] sm:$0xff]
          %v606 = vld [vmem:[#allocation3 + $0x48] sm:$0xff]
          %v607 = vld [vmem:[#allocation3 + $0x50] sm:$0xff]
          %v608 = vld [vmem:[#allocation3 + $0x58] sm:$0xff]
          %v609 = vld [vmem:[#allocation3 + $0x60] sm:$0xff]
          %v610 = vld [vmem:[#allocation3 + $0x68] sm:$0xff]
          %v611 = vld [vmem:[#allocation3 + $0x70] sm:$0xff]
          %v612 = vld [vmem:[#allocation3 + $0x78] sm:$0xff]
          %v613 = vmax.f32 %v597, 0.0
          %v614 = vmax.f32 %v598, 0.0
          %v615 = vmax.f32 %v599, 0.0
          %v616 = vmax.f32 %v600, 0.0
          %v617 = vmax.f32 %v601, 0.0
          %v618 = vmax.f32 %v602, 0.0
          %v619 = vmax.f32 %v603, 0.0
          %v620 = vmax.f32 %v604, 0.0
          %v621 = vmax.f32 %v605, 0.0
          %v622 = vmax.f32 %v606, 0.0
          %v623 = vmax.f32 %v607, 0.0
          %v624 = vmax.f32 %v608, 0.0
          %v625 = vmax.f32 %v609, 0.0
          %v626 = vmax.f32 %v610, 0.0
          %v627 = vmax.f32 %v611, 0.0
          %v628 = vmax.f32 %v612, 0.0
          %629 = vst [vmem:[#allocation2] sm:$0xff] %v613
          %630 = vst [vmem:[#allocation2 + $0x8] sm:$0xff] %v614
          %631 = vst [vmem:[#allocation2 + $0x10] sm:$0xff] %v615
          %632 = vst [vmem:[#allocation2 + $0x18] sm:$0xff] %v616
          %633 = vst [vmem:[#allocation2 + $0x20] sm:$0xff] %v617
          %634 = vst [vmem:[#allocation2 + $0x28] sm:$0xff] %v618
          %635 = vst [vmem:[#allocation2 + $0x30] sm:$0xff] %v619
          %636 = vst [vmem:[#allocation2 + $0x38] sm:$0xff] %v620
          %637 = vst [vmem:[#allocation2 + $0x40] sm:$0xff] %v621
          %638 = vst [vmem:[#allocation2 + $0x48] sm:$0xff] %v622
          %639 = vst [vmem:[#allocation2 + $0x50] sm:$0xff] %v623
          %640 = vst [vmem:[#allocation2 + $0x58] sm:$0xff] %v624
          %641 = vst [vmem:[#allocation2 + $0x60] sm:$0xff] %v625
          %642 = vst [vmem:[#allocation2 + $0x68] sm:$0xff] %v626
          %643 = vst [vmem:[#allocation2 + $0x70] sm:$0xff] %v627
          %644 = vst [vmem:[#allocation2 + $0x78] sm:$0xff] %v628
        $region76: #{rgcn_link_prediction_forward.1} parent=67 // pred_fallthru
          _
        %v645 = vld [vmem:[#allocation2] sm:$0xff]
        %v646 = vld [vmem:[#allocation2 + $0x8] sm:$0xff]
        %v647 = vld [vmem:[#allocation2 + $0x10] sm:$0xff]
        %v648 = vld [vmem:[#allocation2 + $0x18] sm:$0xff]
        %v649 = vld [vmem:[#allocation2 + $0x20] sm:$0xff]
        %v650 = vld [vmem:[#allocation2 + $0x28] sm:$0xff]
        %v651 = vld [vmem:[#allocation2 + $0x30] sm:$0xff]
        %v652 = vld [vmem:[#allocation2 + $0x38] sm:$0xff]
        %v653 = vld [vmem:[#allocation2 + $0x40] sm:$0xff]
        %v654 = vld [vmem:[#allocation2 + $0x48] sm:$0xff]
        %v655 = vld [vmem:[#allocation2 + $0x50] sm:$0xff]
        %v656 = vld [vmem:[#allocation2 + $0x58] sm:$0xff]
        %v657 = vld [vmem:[#allocation2 + $0x60] sm:$0xff]
        %v658 = vld [vmem:[#allocation2 + $0x68] sm:$0xff]
        %v659 = vld [vmem:[#allocation2 + $0x70] sm:$0xff]
        %v660 = vld [vmem:[#allocation2 + $0x78] sm:$0xff]
        %v661 = vld [vmem:[%s448] sm:$0xff]
        %v662 = vld [vmem:[%s448 + $0x8] sm:$0xff]
        %v663 = vld [vmem:[%s448 + $0x10] sm:$0xff]
        %v664 = vld [vmem:[%s448 + $0x18] sm:$0xff]
        %v665 = vld [vmem:[%s448 + $0x20] sm:$0xff]
        %v666 = vld [vmem:[%s448 + $0x28] sm:$0xff]
        %v667 = vld [vmem:[%s448 + $0x30] sm:$0xff]
        %v668 = vld [vmem:[%s448 + $0x38] sm:$0xff]
        %v669 = vld [vmem:[%s448 + $0x40] sm:$0xff]
        %v670 = vld [vmem:[%s448 + $0x48] sm:$0xff]
        %v671 = vld [vmem:[%s448 + $0x50] sm:$0xff]
        %v672 = vld [vmem:[%s448 + $0x58] sm:$0xff]
        %v673 = vld [vmem:[%s448 + $0x60] sm:$0xff]
        %v674 = vld [vmem:[%s448 + $0x68] sm:$0xff]
        %v675 = vld [vmem:[%s448 + $0x70] sm:$0xff]
        %v676 = vld [vmem:[%s448 + $0x78] sm:$0xff]
        %v677 = vld [vmem:[%s451] sm:$0x1]
        %v679 = vperm.slane %v677, 0
        %681 = vmatpush.msra.mxu0 %v676
        %682 = vmatpush.msra.mxu0 %v675
        %683 = vmatpush.msra.mxu0 %v674
        %684 = vmatpush.msra.mxu0 %v673
        %685 = vmatpush.msra.mxu0 %v672
        %686 = vmatpush.msra.mxu0 %v671
        %687 = vmatpush.msra.mxu0 %v670
        %688 = vmatpush.msra.mxu0 %v669
        %689 = vmatpush.msra.mxu0 %v668
        %690 = vmatpush.msra.mxu0 %v667
        %691 = vmatpush.msra.mxu0 %v666
        %692 = vmatpush.msra.mxu0 %v665
        %693 = vmatpush.msra.mxu0 %v664
        %694 = vmatpush.msra.mxu0 %v663
        %695 = vmatpush.msra.mxu0 %v662
        %696 = vmatpush.msra.mxu0 %v661
        %697 = vmatmul.f32.gmra.mxu0 %v645
        %v698 = vpop.f32.mrf.mxu0
        %v699 = vadd.f32 %v679, %v698
        %700 = vmatmul.f32.gmra.mxu0 %v646
        %v701 = vpop.f32.mrf.mxu0
        %v702 = vadd.f32 %v679, %v701
        %703 = vmatmul.f32.gmra.mxu0 %v647
        %v704 = vpop.f32.mrf.mxu0
        %v705 = vadd.f32 %v679, %v704
        %706 = vmatmul.f32.gmra.mxu0 %v648
        %v707 = vpop.f32.mrf.mxu0
        %v708 = vadd.f32 %v679, %v707
        %709 = vmatmul.f32.gmra.mxu0 %v649
        %v710 = vpop.f32.mrf.mxu0
        %v711 = vadd.f32 %v679, %v710
        %712 = vmatmul.f32.gmra.mxu0 %v650
        %v713 = vpop.f32.mrf.mxu0
        %v714 = vadd.f32 %v679, %v713
        %715 = vmatmul.f32.gmra.mxu0 %v651
        %v716 = vpop.f32.mrf.mxu0
        %v717 = vadd.f32 %v679, %v716
        %718 = vmatmul.f32.gmra.mxu0 %v652
        %v719 = vpop.f32.mrf.mxu0
        %v720 = vadd.f32 %v679, %v719
        %721 = vmatmul.f32.gmra.mxu0 %v653
        %v722 = vpop.f32.mrf.mxu0
        %v723 = vadd.f32 %v679, %v722
        %724 = vmatmul.f32.gmra.mxu0 %v654
        %v725 = vpop.f32.mrf.mxu0
        %v726 = vadd.f32 %v679, %v725
        %727 = vmatmul.f32.gmra.mxu0 %v655
        %v728 = vpop.f32.mrf.mxu0
        %v729 = vadd.f32 %v679, %v728
        %730 = vmatmul.f32.gmra.mxu0 %v656
        %v731 = vpop.f32.mrf.mxu0
        %v732 = vadd.f32 %v679, %v731
        %733 = vmatmul.f32.gmra.mxu0 %v657
        %v734 = vpop.f32.mrf.mxu0
        %v735 = vadd.f32 %v679, %v734
        %736 = vmatmul.f32.gmra.mxu0 %v658
        %v737 = vpop.f32.mrf.mxu0
        %v738 = vadd.f32 %v679, %v737
        %739 = vmatmul.f32.gmra.mxu0 %v659
        %v740 = vpop.f32.mrf.mxu0
        %v741 = vadd.f32 %v679, %v740
        %742 = vmatmul.f32.gmra.mxu0 %v660
        %v743 = vpop.f32.mrf.mxu0
        %v744 = vadd.f32 %v679, %v743
        %745 = vdwg.mxu0
        %746 = vst [vmem:[#allocation3] sm:$0xff] %v699
        %747 = vst [vmem:[#allocation3 + $0x8] sm:$0xff] %v702
        %748 = vst [vmem:[#allocation3 + $0x10] sm:$0xff] %v705
        %749 = vst [vmem:[#allocation3 + $0x18] sm:$0xff] %v708
        %750 = vst [vmem:[#allocation3 + $0x20] sm:$0xff] %v711
        %751 = vst [vmem:[#allocation3 + $0x28] sm:$0xff] %v714
        %752 = vst [vmem:[#allocation3 + $0x30] sm:$0xff] %v717
        %753 = vst [vmem:[#allocation3 + $0x38] sm:$0xff] %v720
        %754 = vst [vmem:[#allocation3 + $0x40] sm:$0xff] %v723
        %755 = vst [vmem:[#allocation3 + $0x48] sm:$0xff] %v726
        %756 = vst [vmem:[#allocation3 + $0x50] sm:$0xff] %v729
        %757 = vst [vmem:[#allocation3 + $0x58] sm:$0xff] %v732
        %758 = vst [vmem:[#allocation3 + $0x60] sm:$0xff] %v735
        %759 = vst [vmem:[#allocation3 + $0x68] sm:$0xff] %v738
        %760 = vst [vmem:[#allocation3 + $0x70] sm:$0xff] %v741
        %761 = vst [vmem:[#allocation3 + $0x78] sm:$0xff] %v744
      $region68: #{rgcn_link_prediction_forward.1} parent=63 // pred_fallthru
        _
      %v762 = vld [vmem:[#allocation2] sm:$0xff]
      %v763 = vld [vmem:[#allocation2 + $0x8] sm:$0xff]
      %v764 = vld [vmem:[#allocation2 + $0x10] sm:$0xff]
      %v765 = vld [vmem:[#allocation2 + $0x18] sm:$0xff]
      %v766 = vld [vmem:[#allocation2 + $0x20] sm:$0xff]
      %v767 = vld [vmem:[#allocation2 + $0x28] sm:$0xff]
      %v768 = vld [vmem:[#allocation2 + $0x30] sm:$0xff]
      %v769 = vld [vmem:[#allocation2 + $0x38] sm:$0xff]
      %v770 = vld [vmem:[#allocation2 + $0x40] sm:$0xff]
      %v771 = vld [vmem:[#allocation2 + $0x48] sm:$0xff]
      %v772 = vld [vmem:[#allocation2 + $0x50] sm:$0xff]
      %v773 = vld [vmem:[#allocation2 + $0x58] sm:$0xff]
      %v774 = vld [vmem:[#allocation2 + $0x60] sm:$0xff]
      %v775 = vld [vmem:[#allocation2 + $0x68] sm:$0xff]
      %v776 = vld [vmem:[#allocation2 + $0x70] sm:$0xff]
      %v777 = vld [vmem:[#allocation2 + $0x78] sm:$0xff]
      %v778 = vld [vmem:[%s443] sm:$0xff]
      %v779 = vld [vmem:[%s443 + $0x8] sm:$0xff]
      %v780 = vld [vmem:[%s443 + $0x10] sm:$0xff]
      %v781 = vld [vmem:[%s443 + $0x18] sm:$0xff]
      %v782 = vld [vmem:[%s443 + $0x20] sm:$0xff]
      %v783 = vld [vmem:[%s443 + $0x28] sm:$0xff]
      %v784 = vld [vmem:[%s443 + $0x30] sm:$0xff]
      %v785 = vld [vmem:[%s443 + $0x38] sm:$0xff]
      %v786 = vld [vmem:[%s443 + $0x40] sm:$0xff]
      %v787 = vld [vmem:[%s443 + $0x48] sm:$0xff]
      %v788 = vld [vmem:[%s443 + $0x50] sm:$0xff]
      %v789 = vld [vmem:[%s443 + $0x58] sm:$0xff]
      %v790 = vld [vmem:[%s443 + $0x60] sm:$0xff]
      %v791 = vld [vmem:[%s443 + $0x68] sm:$0xff]
      %v792 = vld [vmem:[%s443 + $0x70] sm:$0xff]
      %v793 = vld [vmem:[%s443 + $0x78] sm:$0xff]
      %794 = vmatpush.msra.mxu0 %v793
      %795 = vmatpush.msra.mxu0 %v792
      %796 = vmatpush.msra.mxu0 %v791
      %797 = vmatpush.msra.mxu0 %v790
      %798 = vmatpush.msra.mxu0 %v789
      %799 = vmatpush.msra.mxu0 %v788
      %800 = vmatpush.msra.mxu0 %v787
      %801 = vmatpush.msra.mxu0 %v786
      %802 = vmatpush.msra.mxu0 %v785
      %803 = vmatpush.msra.mxu0 %v784
      %804 = vmatpush.msra.mxu0 %v783
      %805 = vmatpush.msra.mxu0 %v782
      %806 = vmatpush.msra.mxu0 %v781
      %807 = vmatpush.msra.mxu0 %v780
      %808 = vmatpush.msra.mxu0 %v779
      %809 = vmatpush.msra.mxu0 %v778
      %810 = vmatmul.f32.gmra.mxu0 %v762
      %v811 = vpop.f32.mrf.mxu0
      %v812 = vadd.f32 0.0, %v811
      %813 = vmatmul.f32.gmra.mxu0 %v763
      %v814 = vpop.f32.mrf.mxu0
      %v815 = vadd.f32 0.0, %v814
      %816 = vmatmul.f32.gmra.mxu0 %v764
      %v817 = vpop.f32.mrf.mxu0
      %v818 = vadd.f32 0.0, %v817
      %819 = vmatmul.f32.gmra.mxu0 %v765
      %v820 = vpop.f32.mrf.mxu0
      %v821 = vadd.f32 0.0, %v820
      %822 = vmatmul.f32.gmra.mxu0 %v766
      %v823 = vpop.f32.mrf.mxu0
      %v824 = vadd.f32 0.0, %v823
      %825 = vmatmul.f32.gmra.mxu0 %v767
      %v826 = vpop.f32.mrf.mxu0
      %v827 = vadd.f32 0.0, %v826
      %828 = vmatmul.f32.gmra.mxu0 %v768
      %v829 = vpop.f32.mrf.mxu0
      %v830 = vadd.f32 0.0, %v829
      %831 = vmatmul.f32.gmra.mxu0 %v769
      %v832 = vpop.f32.mrf.mxu0
      %v833 = vadd.f32 0.0, %v832
      %834 = vmatmul.f32.gmra.mxu0 %v770
      %v835 = vpop.f32.mrf.mxu0
      %v836 = vadd.f32 0.0, %v835
      %837 = vmatmul.f32.gmra.mxu0 %v771
      %v838 = vpop.f32.mrf.mxu0
      %v839 = vadd.f32 0.0, %v838
      %840 = vmatmul.f32.gmra.mxu0 %v772
      %v841 = vpop.f32.mrf.mxu0
      %v842 = vadd.f32 0.0, %v841
      %843 = vmatmul.f32.gmra.mxu0 %v773
      %v844 = vpop.f32.mrf.mxu0
      %v845 = vadd.f32 0.0, %v844
      %846 = vmatmul.f32.gmra.mxu0 %v774
      %v847 = vpop.f32.mrf.mxu0
      %v848 = vadd.f32 0.0, %v847
      %849 = vmatmul.f32.gmra.mxu0 %v775
      %v850 = vpop.f32.mrf.mxu0
      %v851 = vadd.f32 0.0, %v850
      %852 = vmatmul.f32.gmra.mxu0 %v776
      %v853 = vpop.f32.mrf.mxu0
      %v854 = vadd.f32 0.0, %v853
      %855 = vmatmul.f32.gmra.mxu0 %v777
      %v856 = vpop.f32.mrf.mxu0
      %v857 = vadd.f32 0.0, %v856
      %858 = vdwg.mxu0
      %v859 = vld [vmem:[#allocation3] sm:$0xff]
      %v860 = vld [vmem:[#allocation3 + $0x8] sm:$0xff]
      %v861 = vld [vmem:[#allocation3 + $0x10] sm:$0xff]
      %v862 = vld [vmem:[#allocation3 + $0x18] sm:$0xff]
      %v863 = vld [vmem:[#allocation3 + $0x20] sm:$0xff]
      %v864 = vld [vmem:[#allocation3 + $0x28] sm:$0xff]
      %v865 = vld [vmem:[#allocation3 + $0x30] sm:$0xff]
      %v866 = vld [vmem:[#allocation3 + $0x38] sm:$0xff]
      %v867 = vld [vmem:[#allocation3 + $0x40] sm:$0xff]
      %v868 = vld [vmem:[#allocation3 + $0x48] sm:$0xff]
      %v869 = vld [vmem:[#allocation3 + $0x50] sm:$0xff]
      %v870 = vld [vmem:[#allocation3 + $0x58] sm:$0xff]
      %v871 = vld [vmem:[#allocation3 + $0x60] sm:$0xff]
      %v872 = vld [vmem:[#allocation3 + $0x68] sm:$0xff]
      %v873 = vld [vmem:[#allocation3 + $0x70] sm:$0xff]
      %v874 = vld [vmem:[#allocation3 + $0x78] sm:$0xff]
      %v875 = vld [vmem:[%s434] sm:$0xff]
      %v876 = vld [vmem:[%s434 + $0x8] sm:$0xff]
      %v877 = vld [vmem:[%s434 + $0x10] sm:$0xff]
      %v878 = vld [vmem:[%s434 + $0x18] sm:$0xff]
      %v879 = vld [vmem:[%s434 + $0x20] sm:$0xff]
      %v880 = vld [vmem:[%s434 + $0x28] sm:$0xff]
      %v881 = vld [vmem:[%s434 + $0x30] sm:$0xff]
      %v882 = vld [vmem:[%s434 + $0x38] sm:$0xff]
      %v883 = vld [vmem:[%s434 + $0x40] sm:$0xff]
      %v884 = vld [vmem:[%s434 + $0x48] sm:$0xff]
      %v885 = vld [vmem:[%s434 + $0x50] sm:$0xff]
      %v886 = vld [vmem:[%s434 + $0x58] sm:$0xff]
      %v887 = vld [vmem:[%s434 + $0x60] sm:$0xff]
      %v888 = vld [vmem:[%s434 + $0x68] sm:$0xff]
      %v889 = vld [vmem:[%s434 + $0x70] sm:$0xff]
      %v890 = vld [vmem:[%s434 + $0x78] sm:$0xff]
      %891 = vmatpush.msra.mxu0 %v857
      %892 = vmatpush.msra.mxu0 %v854
      %893 = vmatpush.msra.mxu0 %v851
      %894 = vmatpush.msra.mxu0 %v848
      %895 = vmatpush.msra.mxu0 %v845
      %896 = vmatpush.msra.mxu0 %v842
      %897 = vmatpush.msra.mxu0 %v839
      %898 = vmatpush.msra.mxu0 %v836
      %899 = vmatpush.msra.mxu0 %v833
      %900 = vmatpush.msra.mxu0 %v830
      %901 = vmatpush.msra.mxu0 %v827
      %902 = vmatpush.msra.mxu0 %v824
      %903 = vmatpush.msra.mxu0 %v821
      %904 = vmatpush.msra.mxu0 %v818
      %905 = vmatpush.msra.mxu0 %v815
      %906 = vmatpush.msra.mxu0 %v812
      %907 = vmatmul.f32.gmra.mxu0 %v875
      %v908 = vpop.f32.mrf.mxu0
      %v909 = vadd.f32 0.0, %v908
      %910 = vmatmul.f32.gmra.mxu0 %v876
      %v911 = vpop.f32.mrf.mxu0
      %v912 = vadd.f32 0.0, %v911
      %913 = vmatmul.f32.gmra.mxu0 %v877
      %v914 = vpop.f32.mrf.mxu0
      %v915 = vadd.f32 0.0, %v914
      %916 = vmatmul.f32.gmra.mxu0 %v878
      %v917 = vpop.f32.mrf.mxu0
      %v918 = vadd.f32 0.0, %v917
      %919 = vmatmul.f32.gmra.mxu0 %v879
      %v920 = vpop.f32.mrf.mxu0
      %v921 = vadd.f32 0.0, %v920
      %922 = vmatmul.f32.gmra.mxu0 %v880
      %v923 = vpop.f32.mrf.mxu0
      %v924 = vadd.f32 0.0, %v923
      %925 = vmatmul.f32.gmra.mxu0 %v881
      %v926 = vpop.f32.mrf.mxu0
      %v927 = vadd.f32 0.0, %v926
      %928 = vmatmul.f32.gmra.mxu0 %v882
      %v929 = vpop.f32.mrf.mxu0
      %v930 = vadd.f32 0.0, %v929
      %931 = vmatmul.f32.gmra.mxu0 %v883
      %v932 = vpop.f32.mrf.mxu0
      %v933 = vadd.f32 0.0, %v932
      %934 = vmatmul.f32.gmra.mxu0 %v884
      %v935 = vpop.f32.mrf.mxu0
      %v936 = vadd.f32 0.0, %v935
      %937 = vmatmul.f32.gmra.mxu0 %v885
      %v938 = vpop.f32.mrf.mxu0
      %v939 = vadd.f32 0.0, %v938
      %940 = vmatmul.f32.gmra.mxu0 %v886
      %v941 = vpop.f32.mrf.mxu0
      %v942 = vadd.f32 0.0, %v941
      %943 = vmatmul.f32.gmra.mxu0 %v887
      %v944 = vpop.f32.mrf.mxu0
      %v945 = vadd.f32 0.0, %v944
      %946 = vmatmul.f32.gmra.mxu0 %v888
      %v947 = vpop.f32.mrf.mxu0
      %v948 = vadd.f32 0.0, %v947
      %949 = vmatmul.f32.gmra.mxu0 %v889
      %v950 = vpop.f32.mrf.mxu0
      %v951 = vadd.f32 0.0, %v950
      %952 = vmatmul.f32.gmra.mxu0 %v890
      %v953 = vpop.f32.mrf.mxu0
      %v954 = vadd.f32 0.0, %v953
      %955 = vdwg.mxu0
      %v956 = vadd.f32 %v859, %v909
      %v957 = vadd.f32 %v860, %v912
      %v958 = vadd.f32 %v861, %v915
      %v959 = vadd.f32 %v862, %v918
      %v960 = vadd.f32 %v863, %v921
      %v961 = vadd.f32 %v864, %v924
      %v962 = vadd.f32 %v865, %v927
      %v963 = vadd.f32 %v866, %v930
      %v964 = vadd.f32 %v867, %v933
      %v965 = vadd.f32 %v868, %v936
      %v966 = vadd.f32 %v869, %v939
      %v967 = vadd.f32 %v870, %v942
      %v968 = vadd.f32 %v871, %v945
      %v969 = vadd.f32 %v872, %v948
      %v970 = vadd.f32 %v873, %v951
      %v971 = vadd.f32 %v874, %v954
      %972 = vst [vmem:[#allocation3] sm:$0xff] %v956
      %973 = vst [vmem:[#allocation3 + $0x8] sm:$0xff] %v957
      %974 = vst [vmem:[#allocation3 + $0x10] sm:$0xff] %v958
      %975 = vst [vmem:[#allocation3 + $0x18] sm:$0xff] %v959
      %976 = vst [vmem:[#allocation3 + $0x20] sm:$0xff] %v960
      %977 = vst [vmem:[#allocation3 + $0x28] sm:$0xff] %v961
      %978 = vst [vmem:[#allocation3 + $0x30] sm:$0xff] %v962
      %979 = vst [vmem:[#allocation3 + $0x38] sm:$0xff] %v963
      %980 = vst [vmem:[#allocation3 + $0x40] sm:$0xff] %v964
      %981 = vst [vmem:[#allocation3 + $0x48] sm:$0xff] %v965
      %982 = vst [vmem:[#allocation3 + $0x50] sm:$0xff] %v966
      %983 = vst [vmem:[#allocation3 + $0x58] sm:$0xff] %v967
      %984 = vst [vmem:[#allocation3 + $0x60] sm:$0xff] %v968
      %985 = vst [vmem:[#allocation3 + $0x68] sm:$0xff] %v969
      %986 = vst [vmem:[#allocation3 + $0x70] sm:$0xff] %v970
      %987 = vst [vmem:[#allocation3 + $0x78] sm:$0xff] %v971
      %p988 = scmp.eq.s32.totalorder %s26, 1
      %p989 = scmp.eq.s32.totalorder %s27, 2
      %p990 = pnand %p988, %p989
      %p991 = pneg %p990
      // Predicated region
      $region77: #{rgcn_link_prediction_forward.1} parent=63 // pred_check
        _
      $region78: #{rgcn_link_prediction_forward.1} parent=63 // pred_check_branch
        %993 = sbr.rel (%p990) target = $region80
      $region79: #{rgcn_link_prediction_forward.1} parent=63 // pred_region
        %v994 = vld [vmem:[#allocation3] sm:$0xff]
        %v995 = vld [vmem:[#allocation3 + $0x8] sm:$0xff]
        %v996 = vld [vmem:[#allocation3 + $0x10] sm:$0xff]
        %v997 = vld [vmem:[#allocation3 + $0x18] sm:$0xff]
        %v998 = vld [vmem:[#allocation3 + $0x20] sm:$0xff]
        %v999 = vld [vmem:[#allocation3 + $0x28] sm:$0xff]
        %v1000 = vld [vmem:[#allocation3 + $0x30] sm:$0xff]
        %v1001 = vld [vmem:[#allocation3 + $0x38] sm:$0xff]
        %v1002 = vld [vmem:[#allocation3 + $0x40] sm:$0xff]
        %v1003 = vld [vmem:[#allocation3 + $0x48] sm:$0xff]
        %v1004 = vld [vmem:[#allocation3 + $0x50] sm:$0xff]
        %v1005 = vld [vmem:[#allocation3 + $0x58] sm:$0xff]
        %v1006 = vld [vmem:[#allocation3 + $0x60] sm:$0xff]
        %v1007 = vld [vmem:[#allocation3 + $0x68] sm:$0xff]
        %v1008 = vld [vmem:[#allocation3 + $0x70] sm:$0xff]
        %v1009 = vld [vmem:[#allocation3 + $0x78] sm:$0xff]
        %1010 = vxpose.xlu0.b32.start [1/16] %v994, 128
        %1011 = vxpose.xlu0.b32.cont [2/16] %v995, 128
        %1012 = vxpose.xlu0.b32.cont [3/16] %v996, 128
        %1013 = vxpose.xlu0.b32.cont [4/16] %v997, 128
        %1014 = vxpose.xlu0.b32.cont [5/16] %v998, 128
        %1015 = vxpose.xlu0.b32.cont [6/16] %v999, 128
        %1016 = vxpose.xlu0.b32.cont [7/16] %v1000, 128
        %1017 = vxpose.xlu0.b32.cont [8/16] %v1001, 128
        %1018 = vxpose.xlu0.b32.cont [9/16] %v1002, 128
        %1019 = vxpose.xlu0.b32.cont [10/16] %v1003, 128
        %1020 = vxpose.xlu0.b32.cont [11/16] %v1004, 128
        %1021 = vxpose.xlu0.b32.cont [12/16] %v1005, 128
        %1022 = vxpose.xlu0.b32.cont [13/16] %v1006, 128
        %1023 = vxpose.xlu0.b32.cont [14/16] %v1007, 128
        %1024 = vxpose.xlu0.b32.cont [15/16] %v1008, 128
        %1025 = vxpose.xlu0.b32.end [16/16] %v1009, 128
        %v1026 = vpop.trf.xlu0
        %v1027 = vpop.trf.xlu0
        %v1028 = vpop.trf.xlu0
        %v1029 = vpop.trf.xlu0
        %v1030 = vpop.trf.xlu0
        %v1031 = vpop.trf.xlu0
        %v1032 = vpop.trf.xlu0
        %v1033 = vpop.trf.xlu0
        %v1034 = vpop.trf.xlu0
        %v1035 = vpop.trf.xlu0
        %v1036 = vpop.trf.xlu0
        %v1037 = vpop.trf.xlu0
        %v1038 = vpop.trf.xlu0
        %v1039 = vpop.trf.xlu0
        %v1040 = vpop.trf.xlu0
        %v1041 = vpop.trf.xlu0
        %v1042 = vld [vmem:[%s8] sm:$0xff]
        %v1043 = vld [vmem:[%s8 + $0x8] sm:$0xff]
        %v1044 = vld [vmem:[%s8 + $0x10] sm:$0xff]
        %v1045 = vld [vmem:[%s8 + $0x18] sm:$0xff]
        %v1046 = vld [vmem:[%s8 + $0x20] sm:$0xff]
        %v1047 = vld [vmem:[%s8 + $0x28] sm:$0xff]
        %v1048 = vld [vmem:[%s8 + $0x30] sm:$0xff]
        %v1049 = vld [vmem:[%s8 + $0x38] sm:$0xff]
        %v1050 = vld [vmem:[%s8 + $0x40] sm:$0xff]
        %v1051 = vld [vmem:[%s8 + $0x48] sm:$0xff]
        %v1052 = vld [vmem:[%s8 + $0x50] sm:$0xff]
        %v1053 = vld [vmem:[%s8 + $0x58] sm:$0xff]
        %v1054 = vld [vmem:[%s8 + $0x60] sm:$0xff]
        %v1055 = vld [vmem:[%s8 + $0x68] sm:$0xff]
        %v1056 = vld [vmem:[%s8 + $0x70] sm:$0xff]
        %v1057 = vld [vmem:[%s8 + $0x78] sm:$0xff]
        %1058 = vmatpush.msra.mxu0 %v1057
        %1059 = vmatpush.msra.mxu0 %v1056
        %1060 = vmatpush.msra.mxu0 %v1055
        %1061 = vmatpush.msra.mxu0 %v1054
        %1062 = vmatpush.msra.mxu0 %v1053
        %1063 = vmatpush.msra.mxu0 %v1052
        %1064 = vmatpush.msra.mxu0 %v1051
        %1065 = vmatpush.msra.mxu0 %v1050
        %1066 = vmatpush.msra.mxu0 %v1049
        %1067 = vmatpush.msra.mxu0 %v1048
        %1068 = vmatpush.msra.mxu0 %v1047
        %1069 = vmatpush.msra.mxu0 %v1046
        %1070 = vmatpush.msra.mxu0 %v1045
        %1071 = vmatpush.msra.mxu0 %v1044
        %1072 = vmatpush.msra.mxu0 %v1043
        %1073 = vmatpush.msra.mxu0 %v1042
        %1074 = vmatmul.f32.gmra.mxu0 %v1026
        %v1075 = vpop.f32.mrf.mxu0
        %v1076 = vadd.f32 0.0, %v1075
        %1077 = vmatmul.f32.gmra.mxu0 %v1027
        %v1078 = vpop.f32.mrf.mxu0
        %v1079 = vadd.f32 0.0, %v1078
        %1080 = vmatmul.f32.gmra.mxu0 %v1028
        %v1081 = vpop.f32.mrf.mxu0
        %v1082 = vadd.f32 0.0, %v1081
        %1083 = vmatmul.f32.gmra.mxu0 %v1029
        %v1084 = vpop.f32.mrf.mxu0
        %v1085 = vadd.f32 0.0, %v1084
        %1086 = vmatmul.f32.gmra.mxu0 %v1030
        %v1087 = vpop.f32.mrf.mxu0
        %v1088 = vadd.f32 0.0, %v1087
        %1089 = vmatmul.f32.gmra.mxu0 %v1031
        %v1090 = vpop.f32.mrf.mxu0
        %v1091 = vadd.f32 0.0, %v1090
        %1092 = vmatmul.f32.gmra.mxu0 %v1032
        %v1093 = vpop.f32.mrf.mxu0
        %v1094 = vadd.f32 0.0, %v1093
        %1095 = vmatmul.f32.gmra.mxu0 %v1033
        %v1096 = vpop.f32.mrf.mxu0
        %v1097 = vadd.f32 0.0, %v1096
        %1098 = vmatmul.f32.gmra.mxu0 %v1034
        %v1099 = vpop.f32.mrf.mxu0
        %v1100 = vadd.f32 0.0, %v1099
        %1101 = vmatmul.f32.gmra.mxu0 %v1035
        %v1102 = vpop.f32.mrf.mxu0
        %v1103 = vadd.f32 0.0, %v1102
        %1104 = vmatmul.f32.gmra.mxu0 %v1036
        %v1105 = vpop.f32.mrf.mxu0
        %v1106 = vadd.f32 0.0, %v1105
        %1107 = vmatmul.f32.gmra.mxu0 %v1037
        %v1108 = vpop.f32.mrf.mxu0
        %v1109 = vadd.f32 0.0, %v1108
        %1110 = vmatmul.f32.gmra.mxu0 %v1038
        %v1111 = vpop.f32.mrf.mxu0
        %v1112 = vadd.f32 0.0, %v1111
        %1113 = vmatmul.f32.gmra.mxu0 %v1039
        %v1114 = vpop.f32.mrf.mxu0
        %v1115 = vadd.f32 0.0, %v1114
        %1116 = vmatmul.f32.gmra.mxu0 %v1040
        %v1117 = vpop.f32.mrf.mxu0
        %v1118 = vadd.f32 0.0, %v1117
        %1119 = vmatmul.f32.gmra.mxu0 %v1041
        %v1120 = vpop.f32.mrf.mxu0
        %v1121 = vadd.f32 0.0, %v1120
        %1122 = vdwg.mxu0
        %v1123 = vld [vmem:[%s9] sm:$0xff]
        %v1124 = vld [vmem:[%s9 + $0x8] sm:$0xff]
        %v1125 = vld [vmem:[%s9 + $0x10] sm:$0xff]
        %v1126 = vld [vmem:[%s9 + $0x18] sm:$0xff]
        %v1127 = vld [vmem:[%s9 + $0x20] sm:$0xff]
        %v1128 = vld [vmem:[%s9 + $0x28] sm:$0xff]
        %v1129 = vld [vmem:[%s9 + $0x30] sm:$0xff]
        %v1130 = vld [vmem:[%s9 + $0x38] sm:$0xff]
        %v1131 = vld [vmem:[%s9 + $0x40] sm:$0xff]
        %v1132 = vld [vmem:[%s9 + $0x48] sm:$0xff]
        %v1133 = vld [vmem:[%s9 + $0x50] sm:$0xff]
        %v1134 = vld [vmem:[%s9 + $0x58] sm:$0xff]
        %v1135 = vld [vmem:[%s9 + $0x60] sm:$0xff]
        %v1136 = vld [vmem:[%s9 + $0x68] sm:$0xff]
        %v1137 = vld [vmem:[%s9 + $0x70] sm:$0xff]
        %v1138 = vld [vmem:[%s9 + $0x78] sm:$0xff]
        %1139 = vmatpush.msra.mxu0 %v1138
        %1140 = vmatpush.msra.mxu0 %v1137
        %1141 = vmatpush.msra.mxu0 %v1136
        %1142 = vmatpush.msra.mxu0 %v1135
        %1143 = vmatpush.msra.mxu0 %v1134
        %1144 = vmatpush.msra.mxu0 %v1133
        %1145 = vmatpush.msra.mxu0 %v1132
        %1146 = vmatpush.msra.mxu0 %v1131
        %1147 = vmatpush.msra.mxu0 %v1130
        %1148 = vmatpush.msra.mxu0 %v1129
        %1149 = vmatpush.msra.mxu0 %v1128
        %1150 = vmatpush.msra.mxu0 %v1127
        %1151 = vmatpush.msra.mxu0 %v1126
        %1152 = vmatpush.msra.mxu0 %v1125
        %1153 = vmatpush.msra.mxu0 %v1124
        %1154 = vmatpush.msra.mxu0 %v1123
        %1155 = vmatmul.f32.gmra.mxu0 %v1026
        %v1156 = vpop.f32.mrf.mxu0
        %v1157 = vadd.f32 0.0, %v1156
        %1158 = vmatmul.f32.gmra.mxu0 %v1027
        %v1159 = vpop.f32.mrf.mxu0
        %v1160 = vadd.f32 0.0, %v1159
        %1161 = vmatmul.f32.gmra.mxu0 %v1028
        %v1162 = vpop.f32.mrf.mxu0
        %v1163 = vadd.f32 0.0, %v1162
        %1164 = vmatmul.f32.gmra.mxu0 %v1029
        %v1165 = vpop.f32.mrf.mxu0
        %v1166 = vadd.f32 0.0, %v1165
        %1167 = vmatmul.f32.gmra.mxu0 %v1030
        %v1168 = vpop.f32.mrf.mxu0
        %v1169 = vadd.f32 0.0, %v1168
        %1170 = vmatmul.f32.gmra.mxu0 %v1031
        %v1171 = vpop.f32.mrf.mxu0
        %v1172 = vadd.f32 0.0, %v1171
        %1173 = vmatmul.f32.gmra.mxu0 %v1032
        %v1174 = vpop.f32.mrf.mxu0
        %v1175 = vadd.f32 0.0, %v1174
        %1176 = vmatmul.f32.gmra.mxu0 %v1033
        %v1177 = vpop.f32.mrf.mxu0
        %v1178 = vadd.f32 0.0, %v1177
        %1179 = vmatmul.f32.gmra.mxu0 %v1034
        %v1180 = vpop.f32.mrf.mxu0
        %v1181 = vadd.f32 0.0, %v1180
        %1182 = vmatmul.f32.gmra.mxu0 %v1035
        %v1183 = vpop.f32.mrf.mxu0
        %v1184 = vadd.f32 0.0, %v1183
        %1185 = vmatmul.f32.gmra.mxu0 %v1036
        %v1186 = vpop.f32.mrf.mxu0
        %v1187 = vadd.f32 0.0, %v1186
        %1188 = vmatmul.f32.gmra.mxu0 %v1037
        %v1189 = vpop.f32.mrf.mxu0
        %v1190 = vadd.f32 0.0, %v1189
        %1191 = vmatmul.f32.gmra.mxu0 %v1038
        %v1192 = vpop.f32.mrf.mxu0
        %v1193 = vadd.f32 0.0, %v1192
        %1194 = vmatmul.f32.gmra.mxu0 %v1039
        %v1195 = vpop.f32.mrf.mxu0
        %v1196 = vadd.f32 0.0, %v1195
        %1197 = vmatmul.f32.gmra.mxu0 %v1040
        %v1198 = vpop.f32.mrf.mxu0
        %v1199 = vadd.f32 0.0, %v1198
        %1200 = vmatmul.f32.gmra.mxu0 %v1041
        %v1201 = vpop.f32.mrf.mxu0
        %v1202 = vadd.f32 0.0, %v1201
        %1203 = vdwg.mxu0
        %v1204 = vld [vmem:[%s7] sm:$0xff]
        %v1205 = vld [vmem:[%s7 + $0x8] sm:$0xff]
        %v1206 = vld [vmem:[%s7 + $0x10] sm:$0xff]
        %v1207 = vld [vmem:[%s7 + $0x18] sm:$0xff]
        %v1208 = vld [vmem:[%s7 + $0x20] sm:$0xff]
        %v1209 = vld [vmem:[%s7 + $0x28] sm:$0xff]
        %v1210 = vld [vmem:[%s7 + $0x30] sm:$0xff]
        %v1211 = vld [vmem:[%s7 + $0x38] sm:$0xff]
        %v1212 = vld [vmem:[%s7 + $0x40] sm:$0xff]
        %v1213 = vld [vmem:[%s7 + $0x48] sm:$0xff]
        %v1214 = vld [vmem:[%s7 + $0x50] sm:$0xff]
        %v1215 = vld [vmem:[%s7 + $0x58] sm:$0xff]
        %v1216 = vld [vmem:[%s7 + $0x60] sm:$0xff]
        %v1217 = vld [vmem:[%s7 + $0x68] sm:$0xff]
        %v1218 = vld [vmem:[%s7 + $0x70] sm:$0xff]
        %v1219 = vld [vmem:[%s7 + $0x78] sm:$0xff]
        %v1220 = vld [vmem:[%s10] sm:$0x7]
        %vm1221 = vcmask 23552
        %v1223 = vsel %vm1221, %v1204, 0
        %v1226 = vsel %vm1221, %v1205, 0
        %v1229 = vsel %vm1221, %v1206, 0
        %v1232 = vsel %vm1221, %v1207, 0
        %v1235 = vsel %vm1221, %v1208, 0
        %v1238 = vsel %vm1221, %v1209, 0
        %v1241 = vsel %vm1221, %v1210, 0
        %v1244 = vsel %vm1221, %v1211, 0
        %v1247 = vsel %vm1221, %v1212, 0
        %v1250 = vsel %vm1221, %v1213, 0
        %v1253 = vsel %vm1221, %v1214, 0
        %v1256 = vsel %vm1221, %v1215, 0
        %v1259 = vsel %vm1221, %v1216, 0
        %v1262 = vsel %vm1221, %v1217, 0
        %v1265 = vsel %vm1221, %v1218, 0
        %v1268 = vsel %vm1221, %v1219, 0
        %vm1270 = vcmask 1042432
        %v1272 = vsel %vm1270, %v1220, 0
        %1274 = vmatpush.msra.mxu0 0.0
        %1275 = vmatpush.msra.mxu0 0.0
        %1276 = vmatpush.msra.mxu0 0.0
        %1277 = vmatpush.msra.mxu0 0.0
        %1278 = vmatpush.msra.mxu0 0.0
        %1279 = vmatpush.msra.mxu0 0.0
        %1280 = vmatpush.msra.mxu0 0.0
        %1281 = vmatpush.msra.mxu0 0.0
        %1282 = vmatpush.msra.mxu0 0.0
        %1283 = vmatpush.msra.mxu0 0.0
        %1284 = vmatpush.msra.mxu0 0.0
        %1285 = vmatpush.msra.mxu0 0.0
        %1286 = vmatpush.msra.mxu0 0.0
        %1287 = vmatpush.msra.mxu0 0.0
        %1288 = vmatpush.msra.mxu0 0.0
        %1289 = vmatpush.msra.mxu0 %v1272
        %1290 = vmatmul.f32.gmra.mxu0 %v1223
        %v1291 = vpop.f32.mrf.mxu0
        %v1292 = vadd.f32 0.0, %v1291
        %1293 = vmatmul.f32.gmra.mxu0 %v1226
        %v1294 = vpop.f32.mrf.mxu0
        %v1295 = vadd.f32 0.0, %v1294
        %1296 = vmatmul.f32.gmra.mxu0 %v1229
        %v1297 = vpop.f32.mrf.mxu0
        %v1298 = vadd.f32 0.0, %v1297
        %1299 = vmatmul.f32.gmra.mxu0 %v1232
        %v1300 = vpop.f32.mrf.mxu0
        %v1301 = vadd.f32 0.0, %v1300
        %1302 = vmatmul.f32.gmra.mxu0 %v1235
        %v1303 = vpop.f32.mrf.mxu0
        %v1304 = vadd.f32 0.0, %v1303
        %1305 = vmatmul.f32.gmra.mxu0 %v1238
        %v1306 = vpop.f32.mrf.mxu0
        %v1307 = vadd.f32 0.0, %v1306
        %1308 = vmatmul.f32.gmra.mxu0 %v1241
        %v1309 = vpop.f32.mrf.mxu0
        %v1310 = vadd.f32 0.0, %v1309
        %1311 = vmatmul.f32.gmra.mxu0 %v1244
        %v1312 = vpop.f32.mrf.mxu0
        %v1313 = vadd.f32 0.0, %v1312
        %1314 = vmatmul.f32.gmra.mxu0 %v1247
        %v1315 = vpop.f32.mrf.mxu0
        %v1316 = vadd.f32 0.0, %v1315
        %1317 = vmatmul.f32.gmra.mxu0 %v1250
        %v1318 = vpop.f32.mrf.mxu0
        %v1319 = vadd.f32 0.0, %v1318
        %1320 = vmatmul.f32.gmra.mxu0 %v1253
        %v1321 = vpop.f32.mrf.mxu0
        %v1322 = vadd.f32 0.0, %v1321
        %1323 = vmatmul.f32.gmra.mxu0 %v1256
        %v1324 = vpop.f32.mrf.mxu0
        %v1325 = vadd.f32 0.0, %v1324
        %1326 = vmatmul.f32.gmra.mxu0 %v1259
        %v1327 = vpop.f32.mrf.mxu0
        %v1328 = vadd.f32 0.0, %v1327
        %1329 = vmatmul.f32.gmra.mxu0 %v1262
        %v1330 = vpop.f32.mrf.mxu0
        %v1331 = vadd.f32 0.0, %v1330
        %1332 = vmatmul.f32.gmra.mxu0 %v1265
        %v1333 = vpop.f32.mrf.mxu0
        %v1334 = vadd.f32 0.0, %v1333
        %1335 = vmatmul.f32.gmra.mxu0 %v1268
        %v1336 = vpop.f32.mrf.mxu0
        %v1337 = vadd.f32 0.0, %v1336
        %1338 = vdwg.mxu0
        %v1339 = vmul.f32 %v1076, %v1292
        %v1340 = vmul.f32 %v1079, %v1295
        %v1341 = vmul.f32 %v1082, %v1298
        %v1342 = vmul.f32 %v1085, %v1301
        %v1343 = vmul.f32 %v1088, %v1304
        %v1344 = vmul.f32 %v1091, %v1307
        %v1345 = vmul.f32 %v1094, %v1310
        %v1346 = vmul.f32 %v1097, %v1313
        %v1347 = vmul.f32 %v1100, %v1316
        %v1348 = vmul.f32 %v1103, %v1319
        %v1349 = vmul.f32 %v1106, %v1322
        %v1350 = vmul.f32 %v1109, %v1325
        %v1351 = vmul.f32 %v1112, %v1328
        %v1352 = vmul.f32 %v1115, %v1331
        %v1353 = vmul.f32 %v1118, %v1334
        %v1354 = vmul.f32 %v1121, %v1337
        %v1355 = vmul.f32 %v1339, %v1157
        %v1356 = vmul.f32 %v1340, %v1160
        %v1357 = vmul.f32 %v1341, %v1163
        %v1358 = vmul.f32 %v1342, %v1166
        %v1359 = vmul.f32 %v1343, %v1169
        %v1360 = vmul.f32 %v1344, %v1172
        %v1361 = vmul.f32 %v1345, %v1175
        %v1362 = vmul.f32 %v1346, %v1178
        %v1363 = vmul.f32 %v1347, %v1181
        %v1364 = vmul.f32 %v1348, %v1184
        %v1365 = vmul.f32 %v1349, %v1187
        %v1366 = vmul.f32 %v1350, %v1190
        %v1367 = vmul.f32 %v1351, %v1193
        %v1368 = vmul.f32 %v1352, %v1196
        %v1369 = vmul.f32 %v1353, %v1199
        %v1370 = vmul.f32 %v1354, %v1202
        %v1371 = vadd.f32 %v1355, %v1356
        %v1372 = vadd.f32 %v1371, %v1357
        %v1373 = vadd.f32 %v1372, %v1358
        %v1374 = vadd.f32 %v1373, %v1359
        %v1375 = vadd.f32 %v1374, %v1360
        %v1376 = vadd.f32 %v1375, %v1361
        %v1377 = vadd.f32 %v1376, %v1362
        %v1378 = vadd.f32 %v1377, %v1363
        %v1379 = vadd.f32 %v1378, %v1364
        %v1380 = vadd.f32 %v1379, %v1365
        %v1381 = vadd.f32 %v1380, %v1366
        %v1382 = vadd.f32 %v1381, %v1367
        %v1383 = vadd.f32 %v1382, %v1368
        %v1384 = vadd.f32 %v1383, %v1369
        %v1385 = vadd.f32 %v1384, %v1370
        %v1386 = vrot.slane %v1385, 4
        %v1387 = vadd.f32 %v1385, %v1386
        %v1388 = vrot.slane %v1387, 2
        %v1389 = vadd.f32 %v1387, %v1388
        %v1390 = vrot.slane %v1389, 1
        %v1391 = vadd.f32 %v1389, %v1390
        %1392 = vst [vmem:[%s11] sm:$0x1] %v1391
      $region80: #{rgcn_link_prediction_forward.1} parent=63 // pred_fallthru
        _
      // Predicated region
      $region81: #{rgcn_link_prediction_forward.1} parent=63 // pred_check
        %p1393 = pneg %p300
      $region82: #{rgcn_link_prediction_forward.1} parent=63 // pred_check_branch
        %1395 = sbr.rel (%p1393) target = $region84
      $region83: #{rgcn_link_prediction_forward.1} parent=63 // pred_region
        _
      $region84: #{rgcn_link_prediction_forward.1} parent=63 // pred_fallthru
        _
      // Predicated region
      $region85: #{rgcn_link_prediction_forward.1} parent=63 // pred_check
        %p1396 = pneg %p300
      $region86: #{rgcn_link_prediction_forward.1} parent=63 // pred_check_branch
        %1398 = sbr.rel (%p1396) target = $region88
      $region87: #{rgcn_link_prediction_forward.1} parent=63 // pred_region
        _
      $region88: #{rgcn_link_prediction_forward.1} parent=63 // pred_fallthru
        _
    $region64: #{rgcn_link_prediction_forward.1} parent=5 // pred_fallthru
      _
    %p1399 = scmp.le.s32.totalorder 2, %s17
    // Predicated region
    $region89: #{rgcn_link_prediction_forward.1} parent=5 // pred_check
      %p1400 = pneg %p1399
    $region90: #{rgcn_link_prediction_forward.1} parent=5 // pred_check_branch
      %1402 = sbr.rel (%p1400) target = $region92
    $region91: #{rgcn_link_prediction_forward.1} parent=5 // pred_region
      %s1403 = ssub.s32 %s17, 2
    $region92: #{rgcn_link_prediction_forward.1} parent=5 // pred_fallthru
      _
  $region6: #{rgcn_link_prediction_forward.1} parent=0 // loop_footer
    %s21 = sadd.s32 1, %s17
  $region7: #{rgcn_link_prediction_forward.1} parent=0 // loop_footer_branch
    %16 = sbr.rel target = $region3
  $region8: #{rgcn_link_prediction_forward.1} parent=0 // loop_exit
    _

</llo_original>
